<compile_context>
chip_gen: v7x
topology: tpu7x:2x2x1
jax: 0.10.0
libtpu: 0.0.40
codegen_flags: <defaults>
</compile_context>

<pallas_src>
import numpy as np
import jax
import jax.numpy as jnp
from jax.experimental import pallas as pl
from jax.experimental.pallas import tpu as pltpu

# ----------------------------- sizes -----------------------------------------
N_NODES = 16
N_EDGES = 64
N_SCALAR = 8                        # 8x0e in node features
N_VEC = 8                           # 8x1o in node features
NODE_DIM = N_SCALAR + 3 * N_VEC     # 32
N_ATTR = 4                          # node attrs 4x0e
EDGE_EMB = 8                        # edge embedding 8x0e
SH_DIM = 4                          # edge attrs 1x0e + 1x1o
MLP_HIDDEN = 16
N_TP_W = 4 * 8                      # 4 uvu paths x 8 mult = 32 per-edge TP weights
MSG_SCALAR = 16                     # 16x0e message channels
MSG_VEC = 16                        # 16x1o message channels
MSG_DIM = MSG_SCALAR + 3 * MSG_VEC  # 64
PRE_SCALAR = 16                     # 8 out scalars + 8 gates (irreps_before_act)
PRE_VEC = 8                         # 8x1o gated vectors
PRE_DIM = PRE_SCALAR + 3 * PRE_VEC  # 40
OUTER_DIM = N_ATTR * NODE_DIM       # 128
SE_DIM = SH_DIM + EDGE_EMB          # 12  ([edge_sh | edge_emb])
FUSE1_DIM = MSG_DIM + MLP_HIDDEN    # 80  ([SH expansion | radial hidden])
PRE_K = OUTER_DIM + MSG_DIM         # 192 ([x128*z128 | agg])

LOG2 = 0.6931471805599453
INV_SQRT3 = float(1.0 / np.sqrt(3.0))
INV_AVG_NEIGH = float(N_NODES) / float(N_EDGES)


def _ssp(t):
    # shifted softplus, numerically stable
    return jnp.maximum(t, 0.0) + jnp.log(1.0 + jnp.exp(-jnp.abs(t))) - LOG2


def _silu(t):
    return t * (1.0 / (1.0 + jnp.exp(-t)))


# ----------------------- fused message-passing kernel -------------------------
def fused_mp_kernel(src_ref, dst_ref, x_ref, z_ref, se_ref,
                    w12_ref, bm1_ref, wm2b_ref, bm2b_ref, w1b_ref,
                    pdot_ref, tz_ref, wpre_ref, o_ref):
    x = x_ref[...]                                           # (N, 32) node features

    # ---- one-hot gather / scatter matrices from int32 indices (MXU operands) ---
    src = src_ref[...]                                       # (E, 1) int32
    dst = dst_ref[...]                                       # (1, E) int32
    gat = jnp.where(
        src == jax.lax.broadcasted_iota(jnp.int32, (N_EDGES, N_NODES), 1),
        1.0, 0.0)                                            # (E, N)
    scat = jnp.where(
        dst == jax.lax.broadcasted_iota(jnp.int32, (N_NODES, N_EDGES), 0),
        1.0, 0.0)                                            # (N, E)

    # ---- lin1 applied on N nodes BEFORE the gather (commutes with row-select) --
    xw1 = jnp.dot(x, w1b_ref[...], preferred_element_type=jnp.float32)   # (N, 64)
    L = jnp.dot(gat, xw1, preferred_element_type=jnp.float32)            # (E, 64)

    # ---- fused [sh | emb] matmul -> [SH expansion (64) | radial hidden (16)] ---
    fused = jnp.dot(se_ref[...], w12_ref[...],
                    preferred_element_type=jnp.float32)                  # (E, 80)
    SH = fused[:, :MSG_DIM]                                              # (E, 64)
    h = _silu(fused[:, MSG_DIM:] + bm1_ref[...])                         # (E, 16)
    w_big = jnp.dot(h, wm2b_ref[...],
                    preferred_element_type=jnp.float32) + bm2b_ref[...]  # (E, 64)

    # ---- uvu tensor product: one 64-lane multiply; dot slab via placement matmul
    # msgA cols 8:16 are exactly zero (w1_big / t_sh cols 8:16 are zero by prep).
    msgA = w_big * (L * SH)                                              # (E, 64)
    dot8 = (L[:, 24:32] * SH[:, 16:24]
            + L[:, 40:48] * SH[:, 32:40]
            + L[:, 56:64] * SH[:, 48:56])                                # (E, 8)
    msg = msgA + jnp.dot(w_big[:, 8:16] * dot8, pdot_ref[...],
                         preferred_element_type=jnp.float32)             # (E, 64)

    # ---- scatter-sum over destination nodes (1/avg_neigh folded into weights) --
    agg = jnp.dot(scat, msg, preferred_element_type=jnp.float32)         # (N, 64)

    # ---- fused lin2 + self-connection: [x128*z128 | agg] @ [wsc_big; w2_big] ---
    z128 = jnp.dot(z_ref[...], tz_ref[...],
                   preferred_element_type=jnp.float32)                   # (N, 128)
    x128 = jnp.concatenate([x, x, x, x], axis=1)                         # (N, 128)
    pre = jnp.dot(jnp.concatenate([x128 * z128, agg], axis=1), wpre_ref[...],
                  preferred_element_type=jnp.float32)                    # (N, 40)

    # ---- gate nonlinearity + resnet; single full-width store -------------------
    act_s = _ssp(pre[:, 0:8])
    act_g = _ssp(pre[:, 8:16])
    y = jnp.concatenate(
        [act_s,
         act_g * pre[:, 16:24],
         act_g * pre[:, 24:32],
         act_g * pre[:, 32:40]], axis=1)                                 # (N, 32)
    o_ref[...] = x + y


# ------------------- host-side one-time parameter preprocessing ---------------
def prepare_params(params):
    w1s = np.asarray(params["w1s"], np.float32)
    w1v = np.asarray(params["w1v"], np.float32)
    wm1 = np.asarray(params["wm1"], np.float32)
    bm1 = np.asarray(params["bm1"], np.float32)
    wm2 = np.asarray(params["wm2"], np.float32)
    bm2 = np.asarray(params["bm2"], np.float32)
    w2s = np.asarray(params["w2s"], np.float32)
    w2v = np.asarray(params["w2v"], np.float32)
    wsc0 = np.asarray(params["wsc0"], np.float32)
    wsc1 = np.asarray(params["wsc1"], np.float32)

    # radial-MLP output expanded to message width: [w_a, w_b, (w_c, w_d) x 3],
    # with 1/sqrt(3) folded into the w_b slab (cols 8:16).
    def expand_tp_w(w):
        out = np.concatenate(
            [w[:, 0:8], w[:, 8:16]] + [w[:, 16:24], w[:, 24:32]] * 3, axis=1)
        out[:, 8:16] *= INV_SQRT3
        return out
    wm2_big = expand_tp_w(wm2)                       # (16, 64)
    bm2_big = expand_tp_w(bm2)                       # (1, 64)

    # lin1 with lane tiling folded in: x @ w1_big gives the x-side operand slab.
    w1_big = np.zeros((NODE_DIM, MSG_DIM), np.float32)
    for c0 in (0, 16, 32, 48):                       # xs0 slots (scalar_a + 3x vec_c)
        w1_big[0:8, c0:c0 + 8] = w1s
    for c, c0 in enumerate((24, 40, 56)):            # xv_c slots (vec_d)
        w1_big[8 + 8 * c:16 + 8 * c, c0:c0 + 8] = w1v

    # sh expansion to message width (dot slab 8:16 stays zero; placed in kernel).
    t_sh = np.zeros((SH_DIM, MSG_DIM), np.float32)
    t_sh[0, 0:8] = 1.0
    for c in range(3):
        t_sh[1 + c, 16 + 16 * c:24 + 16 * c] = 1.0   # sh_{c+1} for vec_c slot
        t_sh[0, 24 + 16 * c:32 + 16 * c] = 1.0       # sh0     for vec_d slot

    # the single-multiply msg assembly relies on these columns being zero:
    assert not w1_big[:, 8:16].any()
    assert not t_sh[:, 8:16].any()

    # fused [edge_sh | edge_emb] block-diagonal weight -> [SH(64) | hidden(16)]
    w_sh_emb = np.zeros((SE_DIM, FUSE1_DIM), np.float32)
    w_sh_emb[:SH_DIM, :MSG_DIM] = t_sh
    w_sh_emb[SH_DIM:, MSG_DIM:] = wm1

    # placement matmul: (E,8) dot slab -> cols 8:16 of a (E,64) zero slab
    p_dot = np.zeros((N_SCALAR, MSG_DIM), np.float32)
    p_dot[:, 8:16] = np.eye(N_SCALAR, dtype=np.float32)

    # lin2 as one block-diagonal matmul, 1/avg_num_neighbors folded in
    w2_big = np.zeros((MSG_DIM, PRE_DIM), np.float32)
    w2_big[0:16, 0:16] = w2s
    for c in range(3):
        w2_big[16 + 16 * c:32 + 16 * c, 16 + 8 * c:24 + 8 * c] = w2v
    w2_big *= INV_AVG_NEIGH

    # node-attr expansion: z @ t_z broadcasts each attr over 32 lanes
    t_z = np.zeros((N_ATTR, OUTER_DIM), np.float32)
    for v in range(N_ATTR):
        t_z[v, 32 * v:32 * (v + 1)] = 1.0

    # self-connection FCTP as one (128, 40) matmul on the full outer-product slab
    wsc_big = np.zeros((OUTER_DIM, PRE_DIM), np.float32)
    for v in range(N_ATTR):
        for u in range(8):
            wsc_big[32 * v + u, 0:16] = wsc0[8 * v + u, :]
        for c in range(3):
            for u in range(8):
                wsc_big[32 * v + 8 + 8 * c + u, 16 + 8 * c:24 + 8 * c] = wsc1[8 * v + u, :]

    # fused [self-connection ; lin2] weight for the single (N,192)@(192,40) pass
    w_pre = np.concatenate([wsc_big, w2_big], axis=0)   # (192, 40)

    return {k: jnp.asarray(v) for k, v in dict(
        w_sh_emb=w_sh_emb, bm1=bm1, wm2_big=wm2_big, bm2_big=bm2_big,
        w1_big=w1_big, p_dot=p_dot, t_z=t_z, w_pre=w_pre).items()}


# ------------------------------ wrapper ---------------------------------------
def message_passing(x, z, edge_emb, edge_sh, edge_index, pb):
    # TODO(synk): at production E, move src/dst to SMEM (PrefetchScalarGridSpec)
    #             instead of 1-lane-wide VMEM tensors.
    src = edge_index[0].astype(jnp.int32).reshape(N_EDGES, 1)
    dst = edge_index[1].astype(jnp.int32).reshape(1, N_EDGES)
    se = jnp.concatenate([edge_sh, edge_emb], axis=1)        # (E, 12)

    def full(shape):
        return pl.BlockSpec(shape, lambda i: (0, 0))

    return pl.pallas_call(
        fused_mp_kernel,
        out_shape=jax.ShapeDtypeStruct((N_NODES, NODE_DIM), jnp.float32),
        grid=(1,),
        in_specs=[
            full((N_EDGES, 1)),                # src
            full((1, N_EDGES)),                # dst
            full((N_NODES, NODE_DIM)),         # x (fully resident, 2 KiB)
            full((N_NODES, N_ATTR)),           # z
            full((N_EDGES, SE_DIM)),           # [edge_sh | edge_emb]
            full((SE_DIM, FUSE1_DIM)),         # fused [t_sh | wm1]
            full((1, MLP_HIDDEN)),             # bm1
            full((MLP_HIDDEN, MSG_DIM)),       # wm2_big
            full((1, MSG_DIM)),                # bm2_big
            full((NODE_DIM, MSG_DIM)),         # w1_big
            full((N_SCALAR, MSG_DIM)),         # p_dot placement
            full((N_ATTR, OUTER_DIM)),         # t_z
            full((PRE_K, PRE_DIM)),            # [wsc_big ; w2_big]
        ],
        out_specs=full((N_NODES, NODE_DIM)),
        compiler_params=pltpu.CompilerParams(dimension_semantics=("arbitrary",)),
    )(src, dst, x, z, se,
      pb["w_sh_emb"], pb["bm1"], pb["wm2_big"], pb["bm2_big"], pb["w1_big"],
      pb["p_dot"], pb["t_z"], pb["w_pre"])


# ----------------------- pure-JAX reference (original semantics) ---------------
def reference(x, z, edge_emb, edge_sh, edge_index, params):
    P = jax.lax.Precision.HIGHEST
    src, dst = edge_index[0], edge_index[1]
    xs_all = jnp.take(x, src, axis=0)
    h = _silu(jnp.dot(edge_emb, params["wm1"], precision=P) + params["bm1"])
    w = jnp.dot(h, params["wm2"], precision=P) + params["bm2"]
    xs0 = jnp.dot(xs_all[:, :N_SCALAR], params["w1s"], precision=P)
    xv = [jnp.dot(xs_all[:, N_SCALAR + 8 * c:N_SCALAR + 8 * (c + 1)],
                  params["w1v"], precision=P) for c in range(3)]
    sh0 = edge_sh[:, 0:1]
    w_a, w_b, w_c, w_d = w[:, 0:8], w[:, 8:16], w[:, 16:24], w[:, 24:32]
    m_a = w_a * xs0 * sh0
    dot = xv[0] * edge_sh[:, 1:2] + xv[1] * edge_sh[:, 2:3] + xv[2] * edge_sh[:, 3:4]
    m_b = w_b * dot * INV_SQRT3
    vec_parts = []
    for c in range(3):
        shc = edge_sh[:, 1 + c:2 + c]
        vec_parts.append(jnp.concatenate([w_c * xs0 * shc, w_d * xv[c] * sh0], axis=1))
    msg = jnp.concatenate([m_a, m_b] + vec_parts, axis=1)
    scatter = jax.nn.one_hot(dst, N_NODES, dtype=jnp.float32).T * INV_AVG_NEIGH
    agg = jnp.dot(scatter, msg, precision=P)
    conv_s = jnp.dot(agg[:, :MSG_SCALAR], params["w2s"], precision=P)
    conv_v = [jnp.dot(agg[:, MSG_SCALAR + 16 * c:MSG_SCALAR + 16 * (c + 1)],
                      params["w2v"], precision=P) for c in range(3)]
    xs = x[:, :N_SCALAR]
    outer_s = jnp.concatenate([xs * z[:, v:v + 1] for v in range(N_ATTR)], axis=1)
    sc_s = jnp.dot(outer_s, params["wsc0"], precision=P)
    sc_v = []
    for c in range(3):
        xv_c = x[:, N_SCALAR + 8 * c:N_SCALAR + 8 * (c + 1)]
        outer_v = jnp.concatenate([xv_c * z[:, v:v + 1] for v in range(N_ATTR)], axis=1)
        sc_v.append(jnp.dot(outer_v, params["wsc1"], precision=P))
    pre_s = conv_s + sc_s
    pre_v = [conv_v[c] + sc_v[c] for c in range(3)]
    act_s = _ssp(pre_s[:, :8])
    act_g = _ssp(pre_s[:, 8:16])
    y = jnp.concatenate([act_s] + [act_g * pre_v[c] for c in range(3)], axis=1)
    return x + y


# ------------------------------ main ------------------------------------------
if __name__ == "__main__":
    key = jax.random.PRNGKey(0)
    keys = jax.random.split(key, 16)

    # inputs
    x = jax.random.normal(keys[0], (N_NODES, NODE_DIM), dtype=jnp.float32)
    z = jax.random.normal(keys[1], (N_NODES, N_ATTR), dtype=jnp.float32)
    edge_emb = jax.random.normal(keys[2], (N_EDGES, EDGE_EMB), dtype=jnp.float32)
    vecs = jax.random.normal(keys[3], (N_EDGES, 3), dtype=jnp.float32)
    vecs = vecs / jnp.linalg.norm(vecs, axis=1, keepdims=True)
    edge_sh = jnp.concatenate([jnp.ones((N_EDGES, 1), jnp.float32), vecs], axis=1)
    src = jax.random.randint(keys[4], (N_EDGES,), 0, N_NODES)
    dst = jax.random.randint(keys[5], (N_EDGES,), 0, N_NODES)
    edge_index = jnp.stack([src, dst], axis=0)

    # deterministic synthetic parameters (original e3nn-style small weights)
    def w(k, shape, scale=0.3):
        return scale * jax.random.normal(k, shape, dtype=jnp.float32)

    params = {
        "w1s": w(keys[6], (N_SCALAR, N_SCALAR)),
        "w1v": w(keys[7], (N_VEC, N_VEC)),
        "wm1": w(keys[8], (EDGE_EMB, MLP_HIDDEN)),
        "bm1": w(keys[9], (1, MLP_HIDDEN), 0.1),
        "wm2": w(keys[10], (MLP_HIDDEN, N_TP_W)),
        "bm2": w(keys[11], (1, N_TP_W), 0.1),
        "w2s": w(keys[12], (MSG_SCALAR, PRE_SCALAR)),
        "w2v": w(keys[13], (MSG_VEC, PRE_VEC)),
        "wsc0": w(keys[14], (N_SCALAR * N_ATTR, PRE_SCALAR)),
        "wsc1": w(keys[15], (N_VEC * N_ATTR, PRE_VEC)),
    }
    params_big = prepare_params(params)

    out = message_passing(x, z, edge_emb, edge_sh, edge_index, params_big)
    out = jax.block_until_ready(out)

    assert out.shape == (N_NODES, NODE_DIM)
    assert bool(jnp.all(jnp.isfinite(out)))

    ref = reference(x, z, edge_emb, edge_sh, edge_index, params)
    err = float(jnp.max(jnp.abs(out - ref)))
    assert err < 2e-2, f"kernel vs reference max abs err {err}"

    print("KERNEL_OK")
</pallas_src>

<mosaic_0001>
module attributes {stable_mosaic.version = 11 : i64} {
  func.func @fused_mp_kernel(%arg0: i32, %arg1: memref<64x1xi32, #tpu.memory_space<vmem>>, %arg2: memref<1x64xi32, #tpu.memory_space<vmem>>, %arg3: memref<16x32xf32, #tpu.memory_space<vmem>>, %arg4: memref<16x4xf32, #tpu.memory_space<vmem>>, %arg5: memref<64x12xf32, #tpu.memory_space<vmem>>, %arg6: memref<12x80xf32, #tpu.memory_space<vmem>>, %arg7: memref<1x16xf32, #tpu.memory_space<vmem>>, %arg8: memref<16x64xf32, #tpu.memory_space<vmem>>, %arg9: memref<1x64xf32, #tpu.memory_space<vmem>>, %arg10: memref<32x64xf32, #tpu.memory_space<vmem>>, %arg11: memref<8x64xf32, #tpu.memory_space<vmem>>, %arg12: memref<4x128xf32, #tpu.memory_space<vmem>>, %arg13: memref<192x40xf32, #tpu.memory_space<vmem>>, %arg14: memref<16x32xf32, #tpu.memory_space<vmem>>) attributes {dimension_semantics = [#tpu.dimension_semantics<arbitrary>], iteration_bounds = array<i64: 1>, scalar_prefetch = 0 : i64, scratch_operands = 0 : i64, tpu.core_type = #tpu.core_type<tc>, window_params = [{pipeline_mode = #tpu.pipeline_mode<synchronous>, transform_indices = @transform_0, window_bounds = array<i64: 64, 1>}, {pipeline_mode = #tpu.pipeline_mode<synchronous>, transform_indices = @transform_1, window_bounds = array<i64: 1, 64>}, {pipeline_mode = #tpu.pipeline_mode<synchronous>, transform_indices = @transform_2, window_bounds = array<i64: 16, 32>}, {pipeline_mode = #tpu.pipeline_mode<synchronous>, transform_indices = @transform_3, window_bounds = array<i64: 16, 4>}, {pipeline_mode = #tpu.pipeline_mode<synchronous>, transform_indices = @transform_4, window_bounds = array<i64: 64, 12>}, {pipeline_mode = #tpu.pipeline_mode<synchronous>, transform_indices = @transform_5, window_bounds = array<i64: 12, 80>}, {pipeline_mode = #tpu.pipeline_mode<synchronous>, transform_indices = @transform_6, window_bounds = array<i64: 1, 16>}, {pipeline_mode = #tpu.pipeline_mode<synchronous>, transform_indices = @transform_7, window_bounds = array<i64: 16, 64>}, {pipeline_mode = #tpu.pipeline_mode<synchronous>, transform_indices = @transform_8, window_bounds = array<i64: 1, 64>}, {pipeline_mode = #tpu.pipeline_mode<synchronous>, transform_indices = @transform_9, window_bounds = array<i64: 32, 64>}, {pipeline_mode = #tpu.pipeline_mode<synchronous>, transform_indices = @transform_10, window_bounds = array<i64: 8, 64>}, {pipeline_mode = #tpu.pipeline_mode<synchronous>, transform_indices = @transform_11, window_bounds = array<i64: 4, 128>}, {pipeline_mode = #tpu.pipeline_mode<synchronous>, transform_indices = @transform_12, window_bounds = array<i64: 192, 40>}, {pipeline_mode = #tpu.pipeline_mode<synchronous>, transform_indices = @transform_13, window_bounds = array<i64: 16, 32>}]} {
    %c0 = arith.constant 0 : index
    %c0_0 = arith.constant 0 : index
    %0 = vector.load %arg3[%c0, %c0_0] : memref<16x32xf32, #tpu.memory_space<vmem>>, vector<16x32xf32>
    %c0_1 = arith.constant 0 : index
    %c0_2 = arith.constant 0 : index
    %1 = vector.load %arg1[%c0_1, %c0_2] : memref<64x1xi32, #tpu.memory_space<vmem>>, vector<64x1xi32>
    %c0_3 = arith.constant 0 : index
    %c0_4 = arith.constant 0 : index
    %2 = vector.load %arg2[%c0_3, %c0_4] : memref<1x64xi32, #tpu.memory_space<vmem>>, vector<1x64xi32>
    %3 = tpu.iota {dimensions = array<i32: 1>} : vector<64x16xi32>
    %4 = vector.broadcast %1 : vector<64x1xi32> to vector<64x16xi32>
    %5 = arith.cmpi eq, %4, %3 : vector<64x16xi32>
    %cst = arith.constant 1.000000e+00 : f32
    %cst_5 = arith.constant 0.000000e+00 : f32
    %6 = vector.broadcast %cst : f32 to vector<64x16xf32>
    %7 = vector.broadcast %cst_5 : f32 to vector<64x16xf32>
    %8 = arith.select %5, %6, %7 : vector<64x16xi1>, vector<64x16xf32>
    %9 = tpu.iota {dimensions = array<i32: 0>} : vector<16x64xi32>
    %10 = vector.broadcast %2 : vector<1x64xi32> to vector<16x64xi32>
    %11 = arith.cmpi eq, %10, %9 : vector<16x64xi32>
    %cst_6 = arith.constant 1.000000e+00 : f32
    %cst_7 = arith.constant 0.000000e+00 : f32
    %12 = vector.broadcast %cst_6 : f32 to vector<16x64xf32>
    %13 = vector.broadcast %cst_7 : f32 to vector<16x64xf32>
    %14 = arith.select %11, %12, %13 : vector<16x64xi1>, vector<16x64xf32>
    %c0_8 = arith.constant 0 : index
    %c0_9 = arith.constant 0 : index
    %15 = vector.load %arg10[%c0_8, %c0_9] : memref<32x64xf32, #tpu.memory_space<vmem>>, vector<32x64xf32>
    %cst_10 = arith.constant dense<0.000000e+00> : vector<16x64xf32>
    %16 = tpu.matmul %0, %15, %cst_10 {dimension_numbers = #tpu.dot_dimension_numbers<[1], [0], [0], [1], [0, 0, 1, 1], [], []>} : vector<16x32xf32>, vector<32x64xf32>, vector<16x64xf32> -> vector<16x64xf32>
    %cst_11 = arith.constant dense<0.000000e+00> : vector<64x64xf32>
    %17 = tpu.matmul %8, %16, %cst_11 {dimension_numbers = #tpu.dot_dimension_numbers<[1], [0], [0], [1], [0, 0, 1, 1], [], []>} : vector<64x16xf32>, vector<16x64xf32>, vector<64x64xf32> -> vector<64x64xf32>
    %c0_12 = arith.constant 0 : index
    %c0_13 = arith.constant 0 : index
    %18 = vector.load %arg5[%c0_12, %c0_13] : memref<64x12xf32, #tpu.memory_space<vmem>>, vector<64x12xf32>
    %c0_14 = arith.constant 0 : index
    %c0_15 = arith.constant 0 : index
    %19 = vector.load %arg6[%c0_14, %c0_15] : memref<12x80xf32, #tpu.memory_space<vmem>>, vector<12x80xf32>
    %cst_16 = arith.constant dense<0.000000e+00> : vector<64x80xf32>
    %20 = tpu.matmul %18, %19, %cst_16 {dimension_numbers = #tpu.dot_dimension_numbers<[1], [0], [0], [1], [0, 0, 1, 1], [], []>} : vector<64x12xf32>, vector<12x80xf32>, vector<64x80xf32> -> vector<64x80xf32>
    %21 = vector.extract_strided_slice %20 {offsets = [0, 0], sizes = [64, 64], strides = [1, 1]} : vector<64x80xf32> to vector<64x64xf32>
    %22 = vector.extract_strided_slice %20 {offsets = [0, 64], sizes = [64, 16], strides = [1, 1]} : vector<64x80xf32> to vector<64x16xf32>
    %c0_17 = arith.constant 0 : index
    %c0_18 = arith.constant 0 : index
    %23 = vector.load %arg7[%c0_17, %c0_18] : memref<1x16xf32, #tpu.memory_space<vmem>>, vector<1x16xf32>
    %24 = vector.broadcast %23 : vector<1x16xf32> to vector<64x16xf32>
    %25 = arith.addf %22, %24 : vector<64x16xf32>
    %cst_19 = arith.constant 0.000000e+00 : f32
    %26 = vector.broadcast %cst_19 : f32 to vector<64x16xf32>
    %27 = arith.subf %26, %25 : vector<64x16xf32>
    %28 = math.exp %27 : vector<64x16xf32>
    %cst_20 = arith.constant 1.000000e+00 : f32
    %29 = vector.broadcast %cst_20 : f32 to vector<64x16xf32>
    %30 = arith.addf %29, %28 : vector<64x16xf32>
    %cst_21 = arith.constant 1.000000e+00 : f32
    %31 = vector.broadcast %cst_21 : f32 to vector<64x16xf32>
    %32 = arith.divf %31, %30 : vector<64x16xf32>
    %33 = arith.mulf %25, %32 : vector<64x16xf32>
    %c0_22 = arith.constant 0 : index
    %c0_23 = arith.constant 0 : index
    %34 = vector.load %arg8[%c0_22, %c0_23] : memref<16x64xf32, #tpu.memory_space<vmem>>, vector<16x64xf32>
    %cst_24 = arith.constant dense<0.000000e+00> : vector<64x64xf32>
    %35 = tpu.matmul %33, %34, %cst_24 {dimension_numbers = #tpu.dot_dimension_numbers<[1], [0], [0], [1], [0, 0, 1, 1], [], []>} : vector<64x16xf32>, vector<16x64xf32>, vector<64x64xf32> -> vector<64x64xf32>
    %c0_25 = arith.constant 0 : index
    %c0_26 = arith.constant 0 : index
    %36 = vector.load %arg9[%c0_25, %c0_26] : memref<1x64xf32, #tpu.memory_space<vmem>>, vector<1x64xf32>
    %37 = vector.broadcast %36 : vector<1x64xf32> to vector<64x64xf32>
    %38 = arith.addf %35, %37 : vector<64x64xf32>
    %39 = arith.mulf %17, %21 : vector<64x64xf32>
    %40 = arith.mulf %38, %39 : vector<64x64xf32>
    %41 = vector.extract_strided_slice %17 {offsets = [0, 24], sizes = [64, 8], strides = [1, 1]} : vector<64x64xf32> to vector<64x8xf32>
    %42 = vector.extract_strided_slice %21 {offsets = [0, 16], sizes = [64, 8], strides = [1, 1]} : vector<64x64xf32> to vector<64x8xf32>
    %43 = arith.mulf %41, %42 : vector<64x8xf32>
    %44 = vector.extract_strided_slice %17 {offsets = [0, 40], sizes = [64, 8], strides = [1, 1]} : vector<64x64xf32> to vector<64x8xf32>
    %45 = vector.extract_strided_slice %21 {offsets = [0, 32], sizes = [64, 8], strides = [1, 1]} : vector<64x64xf32> to vector<64x8xf32>
    %46 = arith.mulf %44, %45 : vector<64x8xf32>
    %47 = arith.addf %43, %46 : vector<64x8xf32>
    %48 = vector.extract_strided_slice %17 {offsets = [0, 56], sizes = [64, 8], strides = [1, 1]} : vector<64x64xf32> to vector<64x8xf32>
    %49 = vector.extract_strided_slice %21 {offsets = [0, 48], sizes = [64, 8], strides = [1, 1]} : vector<64x64xf32> to vector<64x8xf32>
    %50 = arith.mulf %48, %49 : vector<64x8xf32>
    %51 = arith.addf %47, %50 : vector<64x8xf32>
    %52 = vector.extract_strided_slice %38 {offsets = [0, 8], sizes = [64, 8], strides = [1, 1]} : vector<64x64xf32> to vector<64x8xf32>
    %53 = arith.mulf %52, %51 : vector<64x8xf32>
    %c0_27 = arith.constant 0 : index
    %c0_28 = arith.constant 0 : index
    %54 = vector.load %arg11[%c0_27, %c0_28] : memref<8x64xf32, #tpu.memory_space<vmem>>, vector<8x64xf32>
    %cst_29 = arith.constant dense<0.000000e+00> : vector<64x64xf32>
    %55 = tpu.matmul %53, %54, %cst_29 {dimension_numbers = #tpu.dot_dimension_numbers<[1], [0], [0], [1], [0, 0, 1, 1], [], []>} : vector<64x8xf32>, vector<8x64xf32>, vector<64x64xf32> -> vector<64x64xf32>
    %56 = arith.addf %40, %55 : vector<64x64xf32>
    %cst_30 = arith.constant dense<0.000000e+00> : vector<16x64xf32>
    %57 = tpu.matmul %14, %56, %cst_30 {dimension_numbers = #tpu.dot_dimension_numbers<[1], [0], [0], [1], [0, 0, 1, 1], [], []>} : vector<16x64xf32>, vector<64x64xf32>, vector<16x64xf32> -> vector<16x64xf32>
    %c0_31 = arith.constant 0 : index
    %c0_32 = arith.constant 0 : index
    %58 = vector.load %arg4[%c0_31, %c0_32] : memref<16x4xf32, #tpu.memory_space<vmem>>, vector<16x4xf32>
    %c0_33 = arith.constant 0 : index
    %c0_34 = arith.constant 0 : index
    %59 = vector.load %arg12[%c0_33, %c0_34] : memref<4x128xf32, #tpu.memory_space<vmem>>, vector<4x128xf32>
    %cst_35 = arith.constant dense<0.000000e+00> : vector<16x128xf32>
    %60 = tpu.matmul %58, %59, %cst_35 {dimension_numbers = #tpu.dot_dimension_numbers<[1], [0], [0], [1], [0, 0, 1, 1], [], []>} : vector<16x4xf32>, vector<4x128xf32>, vector<16x128xf32> -> vector<16x128xf32>
    %61 = tpu.concatenate %0, %0, %0, %0 in 1 : vector<16x32xf32>, vector<16x32xf32>, vector<16x32xf32>, vector<16x32xf32> -> vector<16x128xf32>
    %62 = arith.mulf %61, %60 : vector<16x128xf32>
    %63 = tpu.concatenate %62, %57 in 1 : vector<16x128xf32>, vector<16x64xf32> -> vector<16x192xf32>
    %c0_36 = arith.constant 0 : index
    %c0_37 = arith.constant 0 : index
    %64 = vector.load %arg13[%c0_36, %c0_37] : memref<192x40xf32, #tpu.memory_space<vmem>>, vector<192x40xf32>
    %cst_38 = arith.constant dense<0.000000e+00> : vector<16x40xf32>
    %65 = tpu.matmul %63, %64, %cst_38 {dimension_numbers = #tpu.dot_dimension_numbers<[1], [0], [0], [1], [0, 0, 1, 1], [], []>} : vector<16x192xf32>, vector<192x40xf32>, vector<16x40xf32> -> vector<16x40xf32>
    %66 = vector.extract_strided_slice %65 {offsets = [0, 0], sizes = [16, 8], strides = [1, 1]} : vector<16x40xf32> to vector<16x8xf32>
    %cst_39 = arith.constant 0.000000e+00 : f32
    %67 = vector.broadcast %cst_39 : f32 to vector<16x8xf32>
    %68 = arith.maximumf %66, %67 : vector<16x8xf32>
    %69 = math.absf %66 : vector<16x8xf32>
    %cst_40 = arith.constant 0.000000e+00 : f32
    %70 = vector.broadcast %cst_40 : f32 to vector<16x8xf32>
    %71 = arith.subf %70, %69 : vector<16x8xf32>
    %72 = math.exp %71 : vector<16x8xf32>
    %cst_41 = arith.constant 1.000000e+00 : f32
    %73 = vector.broadcast %cst_41 : f32 to vector<16x8xf32>
    %74 = arith.addf %73, %72 : vector<16x8xf32>
    %75 = math.log %74 : vector<16x8xf32>
    %76 = arith.addf %68, %75 : vector<16x8xf32>
    %cst_42 = arith.constant 0.693147182 : f32
    %77 = vector.broadcast %cst_42 : f32 to vector<16x8xf32>
    %78 = arith.subf %76, %77 : vector<16x8xf32>
    %79 = vector.extract_strided_slice %65 {offsets = [0, 8], sizes = [16, 8], strides = [1, 1]} : vector<16x40xf32> to vector<16x8xf32>
    %cst_43 = arith.constant 0.000000e+00 : f32
    %80 = vector.broadcast %cst_43 : f32 to vector<16x8xf32>
    %81 = arith.maximumf %79, %80 : vector<16x8xf32>
    %82 = math.absf %79 : vector<16x8xf32>
    %cst_44 = arith.constant 0.000000e+00 : f32
    %83 = vector.broadcast %cst_44 : f32 to vector<16x8xf32>
    %84 = arith.subf %83, %82 : vector<16x8xf32>
    %85 = math.exp %84 : vector<16x8xf32>
    %cst_45 = arith.constant 1.000000e+00 : f32
    %86 = vector.broadcast %cst_45 : f32 to vector<16x8xf32>
    %87 = arith.addf %86, %85 : vector<16x8xf32>
    %88 = math.log %87 : vector<16x8xf32>
    %89 = arith.addf %81, %88 : vector<16x8xf32>
    %cst_46 = arith.constant 0.693147182 : f32
    %90 = vector.broadcast %cst_46 : f32 to vector<16x8xf32>
    %91 = arith.subf %89, %90 : vector<16x8xf32>
    %92 = vector.extract_strided_slice %65 {offsets = [0, 16], sizes = [16, 8], strides = [1, 1]} : vector<16x40xf32> to vector<16x8xf32>
    %93 = arith.mulf %91, %92 : vector<16x8xf32>
    %94 = vector.extract_strided_slice %65 {offsets = [0, 24], sizes = [16, 8], strides = [1, 1]} : vector<16x40xf32> to vector<16x8xf32>
    %95 = arith.mulf %91, %94 : vector<16x8xf32>
    %96 = vector.extract_strided_slice %65 {offsets = [0, 32], sizes = [16, 8], strides = [1, 1]} : vector<16x40xf32> to vector<16x8xf32>
    %97 = arith.mulf %91, %96 : vector<16x8xf32>
    %98 = tpu.concatenate %78, %93, %95, %97 in 1 : vector<16x8xf32>, vector<16x8xf32>, vector<16x8xf32>, vector<16x8xf32> -> vector<16x32xf32>
    %99 = arith.addf %0, %98 : vector<16x32xf32>
    %c0_47 = arith.constant 0 : index
    %c0_48 = arith.constant 0 : index
    %100 = vector.load %arg14[%c0_47, %c0_48] : memref<16x32xf32, #tpu.memory_space<vmem>>, vector<16x32xf32>
    tpu.vector_store %arg14[%c0_47, %c0_48], %99 {strides = array<i32>} : memref<16x32xf32, #tpu.memory_space<vmem>>, vector<16x32xf32>,
    return
  }
  func.func @transform_0(%arg0: i32) -> (i32, i32) {
    %c0_i32 = arith.constant 0 : i32
    %c0_i32_0 = arith.constant 0 : i32
    %c0_i32_1 = arith.constant 0 : i32
    return %c0_i32, %c0_i32_0 : i32, i32
  }
  func.func @transform_1(%arg0: i32) -> (i32, i32) {
    %c0_i32 = arith.constant 0 : i32
    %c0_i32_0 = arith.constant 0 : i32
    %c0_i32_1 = arith.constant 0 : i32
    return %c0_i32, %c0_i32_0 : i32, i32
  }
  func.func @transform_2(%arg0: i32) -> (i32, i32) {
    %c0_i32 = arith.constant 0 : i32
    %c0_i32_0 = arith.constant 0 : i32
    %c0_i32_1 = arith.constant 0 : i32
    return %c0_i32, %c0_i32_0 : i32, i32
  }
  func.func @transform_3(%arg0: i32) -> (i32, i32) {
    %c0_i32 = arith.constant 0 : i32
    %c0_i32_0 = arith.constant 0 : i32
    %c0_i32_1 = arith.constant 0 : i32
    return %c0_i32, %c0_i32_0 : i32, i32
  }
  func.func @transform_4(%arg0: i32) -> (i32, i32) {
    %c0_i32 = arith.constant 0 : i32
    %c0_i32_0 = arith.constant 0 : i32
    %c0_i32_1 = arith.constant 0 : i32
    return %c0_i32, %c0_i32_0 : i32, i32
  }
  func.func @transform_5(%arg0: i32) -> (i32, i32) {
    %c0_i32 = arith.constant 0 : i32
    %c0_i32_0 = arith.constant 0 : i32
    %c0_i32_1 = arith.constant 0 : i32
    return %c0_i32, %c0_i32_0 : i32, i32
  }
  func.func @transform_6(%arg0: i32) -> (i32, i32) {
    %c0_i32 = arith.constant 0 : i32
    %c0_i32_0 = arith.constant 0 : i32
    %c0_i32_1 = arith.constant 0 : i32
    return %c0_i32, %c0_i32_0 : i32, i32
  }
  func.func @transform_7(%arg0: i32) -> (i32, i32) {
    %c0_i32 = arith.constant 0 : i32
    %c0_i32_0 = arith.constant 0 : i32
    %c0_i32_1 = arith.constant 0 : i32
    return %c0_i32, %c0_i32_0 : i32, i32
  }
  func.func @transform_8(%arg0: i32) -> (i32, i32) {
    %c0_i32 = arith.constant 0 : i32
    %c0_i32_0 = arith.constant 0 : i32
    %c0_i32_1 = arith.constant 0 : i32
    return %c0_i32, %c0_i32_0 : i32, i32
  }
  func.func @transform_9(%arg0: i32) -> (i32, i32) {
    %c0_i32 = arith.constant 0 : i32
    %c0_i32_0 = arith.constant 0 : i32
    %c0_i32_1 = arith.constant 0 : i32
    return %c0_i32, %c0_i32_0 : i32, i32
  }
  func.func @transform_10(%arg0: i32) -> (i32, i32) {
    %c0_i32 = arith.constant 0 : i32
    %c0_i32_0 = arith.constant 0 : i32
    %c0_i32_1 = arith.constant 0 : i32
    return %c0_i32, %c0_i32_0 : i32, i32
  }
  func.func @transform_11(%arg0: i32) -> (i32, i32) {
    %c0_i32 = arith.constant 0 : i32
    %c0_i32_0 = arith.constant 0 : i32
    %c0_i32_1 = arith.constant 0 : i32
    return %c0_i32, %c0_i32_0 : i32, i32
  }
  func.func @transform_12(%arg0: i32) -> (i32, i32) {
    %c0_i32 = arith.constant 0 : i32
    %c0_i32_0 = arith.constant 0 : i32
    %c0_i32_1 = arith.constant 0 : i32
    return %c0_i32, %c0_i32_0 : i32, i32
  }
  func.func @transform_13(%arg0: i32) -> (i32, i32) {
    %c0_i32 = arith.constant 0 : i32
    %c0_i32_0 = arith.constant 0 : i32
    %c0_i32_1 = arith.constant 0 : i32
    return %c0_i32, %c0_i32_0 : i32, i32
  }
}

</mosaic_0001>

<llo_original>
// kernel: tpu_custom_call.1
$region0: #{tpu_custom_call.1}
  #allocation0 [shape = 'u32[]', space=smem, size = 0x4, offset = 0x4, fixed_abs, tag = 'smem constant byte address 0x4 - core index']
  #allocation1 [shape = 'u32[144,128]{1,0:T(1,128)}', space=vmem, size = 0x12000, scoped, tag = 'internal scratch']
  %s0 = inlined_call_operand.vmem [shape: s32[64,1], index: 0, kind: input, shape index: {}]
  %s1 = inlined_call_operand.vmem [shape: s32[1,64], index: 1, kind: input, shape index: {}]
  %s2 = inlined_call_operand.vmem [shape: f32[16,32], index: 2, kind: input, shape index: {}]
  %s3 = inlined_call_operand.vmem [shape: f32[16,4], index: 3, kind: input, shape index: {}]
  %s4 = inlined_call_operand.vmem [shape: f32[64,12], index: 4, kind: input, shape index: {}]
  %s5 = inlined_call_operand.vmem [shape: f32[12,80], index: 5, kind: input, shape index: {}]
  %s6 = inlined_call_operand.vmem [shape: f32[1,16], index: 6, kind: input, shape index: {}]
  %s7 = inlined_call_operand.vmem [shape: f32[16,64], index: 7, kind: input, shape index: {}]
  %s8 = inlined_call_operand.vmem [shape: f32[1,64], index: 8, kind: input, shape index: {}]
  %s9 = inlined_call_operand.vmem [shape: f32[32,64], index: 9, kind: input, shape index: {}]
  %s10 = inlined_call_operand.vmem [shape: f32[8,64], index: 10, kind: input, shape index: {}]
  %s11 = inlined_call_operand.vmem [shape: f32[4,128], index: 11, kind: input, shape index: {}]
  %s12 = inlined_call_operand.vmem [shape: f32[192,40], index: 12, kind: input, shape index: {}]
  %s13 = inlined_call_operand.hbm [shape: f32[16,32], index: 13, kind: output, shape index: {}]
  %s14 = sld [smem:[#allocation0]]
  $region62: #{tpu_custom_call.1} parent=0
    _
  %s16 = ssub.s32 1, %s14
  %s17 = scalar_select 0, %s16, %s14
  $region1: #{tpu_custom_call.1} parent=0
    #allocation2 [shape = 'u8[8192]{0}', space=vmem, size = 0x2000, scoped, tag = 'output window, operand 0, single buffered']
    #allocation3 [shape = 's32[1]{0}', space=sflag, size = 0x4, scoped, tag = 'scoped memory for tpu_custom_call.1']
    %18 = vsyncpa [#allocation3], 0
    // Predicated region
    $region2: #{tpu_custom_call.1} parent=1 // pred_check
      _
    $region3: #{tpu_custom_call.1} parent=1 // pred_check_branch
      %20 = sbr.rel (0) target = $region5
    $region4: #{tpu_custom_call.1} parent=1 // pred_region
      _
    $region5: #{tpu_custom_call.1} parent=1 // pred_fallthru
      _
    // Predicated region
    $region6: #{tpu_custom_call.1} parent=1 // pred_check
      _
    $region7: #{tpu_custom_call.1} parent=1 // pred_check_branch
      %22 = sbr.rel (0) target = $region9
    $region8: #{tpu_custom_call.1} parent=1 // pred_region
      _
    $region9: #{tpu_custom_call.1} parent=1 // pred_fallthru
      _
    // Predicated region
    $region10: #{tpu_custom_call.1} parent=1 // pred_check
      _
    $region11: #{tpu_custom_call.1} parent=1 // pred_check_branch
      %24 = sbr.rel (0) target = $region13
    $region12: #{tpu_custom_call.1} parent=1 // pred_region
      _
    $region13: #{tpu_custom_call.1} parent=1 // pred_fallthru
      _
    // Predicated region
    $region14: #{tpu_custom_call.1} parent=1 // pred_check
      _
    $region15: #{tpu_custom_call.1} parent=1 // pred_check_branch
      %26 = sbr.rel (0) target = $region17
    $region16: #{tpu_custom_call.1} parent=1 // pred_region
      _
    $region17: #{tpu_custom_call.1} parent=1 // pred_fallthru
      _
    // Predicated region
    $region18: #{tpu_custom_call.1} parent=1 // pred_check
      _
    $region19: #{tpu_custom_call.1} parent=1 // pred_check_branch
      %28 = sbr.rel (0) target = $region21
    $region20: #{tpu_custom_call.1} parent=1 // pred_region
      _
    $region21: #{tpu_custom_call.1} parent=1 // pred_fallthru
      _
    // Predicated region
    $region22: #{tpu_custom_call.1} parent=1 // pred_check
      _
    $region23: #{tpu_custom_call.1} parent=1 // pred_check_branch
      %30 = sbr.rel (0) target = $region25
    $region24: #{tpu_custom_call.1} parent=1 // pred_region
      _
    $region25: #{tpu_custom_call.1} parent=1 // pred_fallthru
      _
    // Predicated region
    $region26: #{tpu_custom_call.1} parent=1 // pred_check
      _
    $region27: #{tpu_custom_call.1} parent=1 // pred_check_branch
      %32 = sbr.rel (0) target = $region29
    $region28: #{tpu_custom_call.1} parent=1 // pred_region
      _
    $region29: #{tpu_custom_call.1} parent=1 // pred_fallthru
      _
    // Predicated region
    $region30: #{tpu_custom_call.1} parent=1 // pred_check
      _
    $region31: #{tpu_custom_call.1} parent=1 // pred_check_branch
      %34 = sbr.rel (0) target = $region33
    $region32: #{tpu_custom_call.1} parent=1 // pred_region
      _
    $region33: #{tpu_custom_call.1} parent=1 // pred_fallthru
      _
    // Predicated region
    $region34: #{tpu_custom_call.1} parent=1 // pred_check
      _
    $region35: #{tpu_custom_call.1} parent=1 // pred_check_branch
      %36 = sbr.rel (0) target = $region37
    $region36: #{tpu_custom_call.1} parent=1 // pred_region
      _
    $region37: #{tpu_custom_call.1} parent=1 // pred_fallthru
      _
    // Predicated region
    $region38: #{tpu_custom_call.1} parent=1 // pred_check
      _
    $region39: #{tpu_custom_call.1} parent=1 // pred_check_branch
      %38 = sbr.rel (0) target = $region41
    $region40: #{tpu_custom_call.1} parent=1 // pred_region
      _
    $region41: #{tpu_custom_call.1} parent=1 // pred_fallthru
      _
    // Predicated region
    $region42: #{tpu_custom_call.1} parent=1 // pred_check
      _
    $region43: #{tpu_custom_call.1} parent=1 // pred_check_branch
      %40 = sbr.rel (0) target = $region45
    $region44: #{tpu_custom_call.1} parent=1 // pred_region
      _
    $region45: #{tpu_custom_call.1} parent=1 // pred_fallthru
      _
    // Predicated region
    $region46: #{tpu_custom_call.1} parent=1 // pred_check
      _
    $region47: #{tpu_custom_call.1} parent=1 // pred_check_branch
      %42 = sbr.rel (0) target = $region49
    $region48: #{tpu_custom_call.1} parent=1 // pred_region
      _
    $region49: #{tpu_custom_call.1} parent=1 // pred_fallthru
      _
    // Predicated region
    $region50: #{tpu_custom_call.1} parent=1 // pred_check
      _
    $region51: #{tpu_custom_call.1} parent=1 // pred_check_branch
      %44 = sbr.rel (0) target = $region53
    $region52: #{tpu_custom_call.1} parent=1 // pred_region
      _
    $region53: #{tpu_custom_call.1} parent=1 // pred_fallthru
      _
    %v45 = vld [vmem:[%s2] sm:$0xff]
    %v46 = vld [vmem:[%s2 + $0x8] sm:$0xff]
    %v47 = vld [vmem:[%s0] sm:$0xff]
    %v48 = vld [vmem:[%s0 + $0x8] sm:$0xff]
    %v49 = vld [vmem:[%s0 + $0x10] sm:$0xff]
    %v50 = vld [vmem:[%s0 + $0x18] sm:$0xff]
    %v51 = vld [vmem:[%s0 + $0x20] sm:$0xff]
    %v52 = vld [vmem:[%s0 + $0x28] sm:$0xff]
    %v53 = vld [vmem:[%s0 + $0x30] sm:$0xff]
    %v54 = vld [vmem:[%s0 + $0x38] sm:$0xff]
    %v55 = vld [vmem:[%s1] sm:$0x1]
    %v56 = vlaneseq
    %v57 = vand.u32 %v56, 127
    %58 = vset.pattern.permute.xlu0 0
    %59 = vperm.xlu0 %58, %v47
    %v60 = vpop.permute.xlu0 %59
    %61 = vset.pattern.permute.xlu0 0
    %62 = vperm.xlu0 %61, %v48
    %v63 = vpop.permute.xlu0 %62
    %64 = vset.pattern.permute.xlu0 0
    %65 = vperm.xlu0 %64, %v49
    %v66 = vpop.permute.xlu0 %65
    %67 = vset.pattern.permute.xlu0 0
    %68 = vperm.xlu0 %67, %v50
    %v69 = vpop.permute.xlu0 %68
    %70 = vset.pattern.permute.xlu0 0
    %71 = vperm.xlu0 %70, %v51
    %v72 = vpop.permute.xlu0 %71
    %73 = vset.pattern.permute.xlu0 0
    %74 = vperm.xlu0 %73, %v52
    %v75 = vpop.permute.xlu0 %74
    %76 = vset.pattern.permute.xlu0 0
    %77 = vperm.xlu0 %76, %v53
    %v78 = vpop.permute.xlu0 %77
    %79 = vset.pattern.permute.xlu0 0
    %80 = vperm.xlu0 %79, %v54
    %v81 = vpop.permute.xlu0 %80
    %vm82 = vcmp.eq.s32.totalorder %v60, %v57
    %vm83 = vcmp.eq.s32.totalorder %v63, %v57
    %vm84 = vcmp.eq.s32.totalorder %v66, %v57
    %vm85 = vcmp.eq.s32.totalorder %v69, %v57
    %vm86 = vcmp.eq.s32.totalorder %v72, %v57
    %vm87 = vcmp.eq.s32.totalorder %v75, %v57
    %vm88 = vcmp.eq.s32.totalorder %v78, %v57
    %vm89 = vcmp.eq.s32.totalorder %v81, %v57
    %v90 = vsel %vm82, 1.0, 0.0
    %v91 = vsel %vm83, 1.0, 0.0
    %v92 = vsel %vm84, 1.0, 0.0
    %v93 = vsel %vm85, 1.0, 0.0
    %v94 = vsel %vm86, 1.0, 0.0
    %v95 = vsel %vm87, 1.0, 0.0
    %v96 = vsel %vm88, 1.0, 0.0
    %v97 = vsel %vm89, 1.0, 0.0
    %v98 = vlaneseq
    %v99 = vshrl.u32 %v98, 7
    %v100 = vadd.s32 %v99, 8
    %v101 = vlaneseq
    %v102 = vshrl.u32 %v101, 7
    %v103 = vsub.s32 0, %v102
    %v104 = vrot.slane %v55, %v103
    %vm105 = vcmp.eq.s32.totalorder %v104, %v99
    %vm106 = vcmp.eq.s32.totalorder %v104, %v100
    %v107 = vsel %vm105, 1.0, 0.0
    %v108 = vsel %vm106, 1.0, 0.0
    %v109 = vld [vmem:[%s9] sm:$0xff]
    %v110 = vld [vmem:[%s9 + $0x8] sm:$0xff]
    %v111 = vld [vmem:[%s9 + $0x10] sm:$0xff]
    %v112 = vld [vmem:[%s9 + $0x18] sm:$0xff]
    %vm113 = vcmask 261120
    %v115 = vsel %vm113, %v45, 0
    %v118 = vsel %vm113, %v46, 0
    %120 = vmatprep.subr.mxu0 0.0
    %121 = vmatpush1.msra.mxu0 %v109
    %122 = vmatprep.subr.mxu0 0.0
    %123 = vmatpush1.msra.mxu0 %v110
    %124 = vmatprep.subr.mxu0 0.0
    %125 = vmatpush1.msra.mxu0 %v111
    %126 = vmatprep.subr.mxu0 0.0
    %127 = vmatpush1.msra.mxu0 %v112
    %128 = vmatprep.subr.mxu0 0.0
    %129 = vmatpush1.msra.mxu0 0.0
    %130 = vmatprep.subr.mxu0 0.0
    %131 = vmatpush1.msra.mxu0 0.0
    %132 = vmatprep.subr.mxu0 0.0
    %133 = vmatpush1.msra.mxu0 0.0
    %134 = vmatprep.subr.mxu0 0.0
    %135 = vmatpush1.msra.mxu0 0.0
    %136 = vmatprep.subr.mxu0 0.0
    %137 = vmatpush1.msra.mxu0 0.0
    %138 = vmatprep.subr.mxu0 0.0
    %139 = vmatpush1.msra.mxu0 0.0
    %140 = vmatprep.subr.mxu0 0.0
    %141 = vmatpush1.msra.mxu0 0.0
    %142 = vmatprep.subr.mxu0 0.0
    %143 = vmatpush1.msra.mxu0 0.0
    %144 = vmatprep.subr.mxu0 0.0
    %145 = vmatpush1.msra.mxu0 0.0
    %146 = vmatprep.subr.mxu0 0.0
    %147 = vmatpush1.msra.mxu0 0.0
    %148 = vmatprep.subr.mxu0 0.0
    %149 = vmatpush1.msra.mxu0 0.0
    %150 = vmatprep.subr.mxu0 0.0
    %151 = vmatpush1.msra.mxu0 0.0
    %152 = vmatprep.subr.mxu0 0.0
    %153 = vmatpush1.msra.mxu0 0.0
    %154 = vmatprep.subr.mxu0 0.0
    %155 = vmatpush1.msra.mxu0 0.0
    %156 = vmatprep.subr.mxu0 0.0
    %157 = vmatpush1.msra.mxu0 0.0
    %158 = vmatprep.subr.mxu0 0.0
    %159 = vmatpush1.msra.mxu0 0.0
    %160 = vmatprep.subr.mxu0 0.0
    %161 = vmatpush1.msra.mxu0 0.0
    %162 = vmatprep.subr.mxu0 0.0
    %163 = vmatpush1.msra.mxu0 0.0
    %164 = vmatprep.subr.mxu0 0.0
    %165 = vmatpush1.msra.mxu0 0.0
    %166 = vmatprep.subr.mxu0 0.0
    %167 = vmatpush1.msra.mxu0 0.0
    %168 = vmatprep.subr.mxu0 0.0
    %169 = vmatpush1.msra.mxu0 0.0
    %170 = vmatprep.subr.mxu0 0.0
    %171 = vmatpush1.msra.mxu0 0.0
    %172 = vmatprep.subr.mxu0 0.0
    %173 = vmatpush1.msra.mxu0 0.0
    %174 = vmatprep.subr.mxu0 0.0
    %175 = vmatpush1.msra.mxu0 0.0
    %176 = vmatprep.subr.mxu0 0.0
    %177 = vmatpush1.msra.mxu0 0.0
    %178 = vmatprep.subr.mxu0 0.0
    %179 = vmatpush1.msra.mxu0 0.0
    %180 = vmatprep.subr.mxu0 0.0
    %181 = vmatpush1.msra.mxu0 0.0
    %182 = vmatprep.subr.mxu0 0.0
    %183 = vmatpush1.msra.mxu0 0.0
    %184 = vmatprep.mubr.f32.mxu0 0.0
    %185 = vmatmul.mubr.f32.gmra.mrb[0].mxu0 %v115
    %v186 = vpop.f32.mrb[0].mxu0
    %v187 = vadd.f32 0.0, %v186
    %v188 = vpop.f32.mrb[0].mxu0
    %189 = vmatprep.mubr.f32.mxu0 0.0
    %190 = vmatmul.mubr.f32.gmra.mrb[0].mxu0 %v118
    %v191 = vpop.f32.mrb[0].mxu0
    %v192 = vadd.f32 0.0, %v191
    %v193 = vpop.f32.mrb[0].mxu0
    %194 = vdwg.mxu0
    %vm195 = vcmask 130048
    %v197 = vsel %vm195, %v90, 0
    %v200 = vsel %vm195, %v91, 0
    %v203 = vsel %vm195, %v92, 0
    %v206 = vsel %vm195, %v93, 0
    %v209 = vsel %vm195, %v94, 0
    %v212 = vsel %vm195, %v95, 0
    %v215 = vsel %vm195, %v96, 0
    %v218 = vsel %vm195, %v97, 0
    %220 = vmatprep.subr.mxu0 0.0
    %221 = vmatpush1.msra.mxu0 %v187
    %222 = vmatprep.subr.mxu0 0.0
    %223 = vmatpush1.msra.mxu0 %v192
    %224 = vmatprep.subr.mxu0 0.0
    %225 = vmatpush1.msra.mxu0 0.0
    %226 = vmatprep.subr.mxu0 0.0
    %227 = vmatpush1.msra.mxu0 0.0
    %228 = vmatprep.subr.mxu0 0.0
    %229 = vmatpush1.msra.mxu0 0.0
    %230 = vmatprep.subr.mxu0 0.0
    %231 = vmatpush1.msra.mxu0 0.0
    %232 = vmatprep.subr.mxu0 0.0
    %233 = vmatpush1.msra.mxu0 0.0
    %234 = vmatprep.subr.mxu0 0.0
    %235 = vmatpush1.msra.mxu0 0.0
    %236 = vmatprep.subr.mxu0 0.0
    %237 = vmatpush1.msra.mxu0 0.0
    %238 = vmatprep.subr.mxu0 0.0
    %239 = vmatpush1.msra.mxu0 0.0
    %240 = vmatprep.subr.mxu0 0.0
    %241 = vmatpush1.msra.mxu0 0.0
    %242 = vmatprep.subr.mxu0 0.0
    %243 = vmatpush1.msra.mxu0 0.0
    %244 = vmatprep.subr.mxu0 0.0
    %245 = vmatpush1.msra.mxu0 0.0
    %246 = vmatprep.subr.mxu0 0.0
    %247 = vmatpush1.msra.mxu0 0.0
    %248 = vmatprep.subr.mxu0 0.0
    %249 = vmatpush1.msra.mxu0 0.0
    %250 = vmatprep.subr.mxu0 0.0
    %251 = vmatpush1.msra.mxu0 0.0
    %252 = vmatprep.subr.mxu0 0.0
    %253 = vmatpush1.msra.mxu0 0.0
    %254 = vmatprep.subr.mxu0 0.0
    %255 = vmatpush1.msra.mxu0 0.0
    %256 = vmatprep.subr.mxu0 0.0
    %257 = vmatpush1.msra.mxu0 0.0
    %258 = vmatprep.subr.mxu0 0.0
    %259 = vmatpush1.msra.mxu0 0.0
    %260 = vmatprep.subr.mxu0 0.0
    %261 = vmatpush1.msra.mxu0 0.0
    %262 = vmatprep.subr.mxu0 0.0
    %263 = vmatpush1.msra.mxu0 0.0
    %264 = vmatprep.subr.mxu0 0.0
    %265 = vmatpush1.msra.mxu0 0.0
    %266 = vmatprep.subr.mxu0 0.0
    %267 = vmatpush1.msra.mxu0 0.0
    %268 = vmatprep.subr.mxu0 0.0
    %269 = vmatpush1.msra.mxu0 0.0
    %270 = vmatprep.subr.mxu0 0.0
    %271 = vmatpush1.msra.mxu0 0.0
    %272 = vmatprep.subr.mxu0 0.0
    %273 = vmatpush1.msra.mxu0 0.0
    %274 = vmatprep.subr.mxu0 0.0
    %275 = vmatpush1.msra.mxu0 0.0
    %276 = vmatprep.subr.mxu0 0.0
    %277 = vmatpush1.msra.mxu0 0.0
    %278 = vmatprep.subr.mxu0 0.0
    %279 = vmatpush1.msra.mxu0 0.0
    %280 = vmatprep.subr.mxu0 0.0
    %281 = vmatpush1.msra.mxu0 0.0
    %282 = vmatprep.subr.mxu0 0.0
    %283 = vmatpush1.msra.mxu0 0.0
    %284 = vmatprep.mubr.f32.mxu0 0.0
    %285 = vmatmul.mubr.f32.gmra.mrb[0].mxu0 %v197
    %v286 = vpop.f32.mrb[0].mxu0
    %v287 = vadd.f32 0.0, %v286
    %v288 = vpop.f32.mrb[0].mxu0
    %289 = vmatprep.mubr.f32.mxu0 0.0
    %290 = vmatmul.mubr.f32.gmra.mrb[0].mxu0 %v200
    %v291 = vpop.f32.mrb[0].mxu0
    %v292 = vadd.f32 0.0, %v291
    %v293 = vpop.f32.mrb[0].mxu0
    %294 = vmatprep.mubr.f32.mxu0 0.0
    %295 = vmatmul.mubr.f32.gmra.mrb[0].mxu0 %v203
    %v296 = vpop.f32.mrb[0].mxu0
    %v297 = vadd.f32 0.0, %v296
    %v298 = vpop.f32.mrb[0].mxu0
    %299 = vmatprep.mubr.f32.mxu0 0.0
    %300 = vmatmul.mubr.f32.gmra.mrb[0].mxu0 %v206
    %v301 = vpop.f32.mrb[0].mxu0
    %v302 = vadd.f32 0.0, %v301
    %v303 = vpop.f32.mrb[0].mxu0
    %304 = vmatprep.mubr.f32.mxu0 0.0
    %305 = vmatmul.mubr.f32.gmra.mrb[0].mxu0 %v209
    %v306 = vpop.f32.mrb[0].mxu0
    %v307 = vadd.f32 0.0, %v306
    %v308 = vpop.f32.mrb[0].mxu0
    %309 = vmatprep.mubr.f32.mxu0 0.0
    %310 = vmatmul.mubr.f32.gmra.mrb[0].mxu0 %v212
    %v311 = vpop.f32.mrb[0].mxu0
    %v312 = vadd.f32 0.0, %v311
    %v313 = vpop.f32.mrb[0].mxu0
    %314 = vmatprep.mubr.f32.mxu0 0.0
    %315 = vmatmul.mubr.f32.gmra.mrb[0].mxu0 %v215
    %v316 = vpop.f32.mrb[0].mxu0
    %v317 = vadd.f32 0.0, %v316
    %v318 = vpop.f32.mrb[0].mxu0
    %319 = vmatprep.mubr.f32.mxu0 0.0
    %320 = vmatmul.mubr.f32.gmra.mrb[0].mxu0 %v218
    %v321 = vpop.f32.mrb[0].mxu0
    %v322 = vadd.f32 0.0, %v321
    %v323 = vpop.f32.mrb[0].mxu0
    %324 = vdwg.mxu0
    %v325 = vld [vmem:[%s4] sm:$0xff]
    %v326 = vld [vmem:[%s4 + $0x8] sm:$0xff]
    %v327 = vld [vmem:[%s4 + $0x10] sm:$0xff]
    %v328 = vld [vmem:[%s4 + $0x18] sm:$0xff]
    %v329 = vld [vmem:[%s4 + $0x20] sm:$0xff]
    %v330 = vld [vmem:[%s4 + $0x28] sm:$0xff]
    %v331 = vld [vmem:[%s4 + $0x30] sm:$0xff]
    %v332 = vld [vmem:[%s4 + $0x38] sm:$0xff]
    %v333 = vld [vmem:[%s5] sm:$0xff]
    %v334 = vld [vmem:[%s5 + $0x8] sm:$0xf]
    %vm335 = vcmask 97280
    %v337 = vsel %vm335, %v325, 0
    %v340 = vsel %vm335, %v326, 0
    %v343 = vsel %vm335, %v327, 0
    %v346 = vsel %vm335, %v328, 0
    %v349 = vsel %vm335, %v329, 0
    %v352 = vsel %vm335, %v330, 0
    %v355 = vsel %vm335, %v331, 0
    %v358 = vsel %vm335, %v332, 0
    %vm360 = vcmask 1043456
    %v362 = vsel %vm360, %v334, 0
    %364 = vmatprep.subr.mxu0 0.0
    %365 = vmatpush1.msra.mxu0 %v333
    %366 = vmatprep.subr.mxu0 0.0
    %367 = vmatpush1.msra.mxu0 %v362
    %368 = vmatprep.subr.mxu0 0.0
    %369 = vmatpush1.msra.mxu0 0.0
    %370 = vmatprep.subr.mxu0 0.0
    %371 = vmatpush1.msra.mxu0 0.0
    %372 = vmatprep.subr.mxu0 0.0
    %373 = vmatpush1.msra.mxu0 0.0
    %374 = vmatprep.subr.mxu0 0.0
    %375 = vmatpush1.msra.mxu0 0.0
    %376 = vmatprep.subr.mxu0 0.0
    %377 = vmatpush1.msra.mxu0 0.0
    %378 = vmatprep.subr.mxu0 0.0
    %379 = vmatpush1.msra.mxu0 0.0
    %380 = vmatprep.subr.mxu0 0.0
    %381 = vmatpush1.msra.mxu0 0.0
    %382 = vmatprep.subr.mxu0 0.0
    %383 = vmatpush1.msra.mxu0 0.0
    %384 = vmatprep.subr.mxu0 0.0
    %385 = vmatpush1.msra.mxu0 0.0
    %386 = vmatprep.subr.mxu0 0.0
    %387 = vmatpush1.msra.mxu0 0.0
    %388 = vmatprep.subr.mxu0 0.0
    %389 = vmatpush1.msra.mxu0 0.0
    %390 = vmatprep.subr.mxu0 0.0
    %391 = vmatpush1.msra.mxu0 0.0
    %392 = vmatprep.subr.mxu0 0.0
    %393 = vmatpush1.msra.mxu0 0.0
    %394 = vmatprep.subr.mxu0 0.0
    %395 = vmatpush1.msra.mxu0 0.0
    %396 = vmatprep.subr.mxu0 0.0
    %397 = vmatpush1.msra.mxu0 0.0
    %398 = vmatprep.subr.mxu0 0.0
    %399 = vmatpush1.msra.mxu0 0.0
    %400 = vmatprep.subr.mxu0 0.0
    %401 = vmatpush1.msra.mxu0 0.0
    %402 = vmatprep.subr.mxu0 0.0
    %403 = vmatpush1.msra.mxu0 0.0
    %404 = vmatprep.subr.mxu0 0.0
    %405 = vmatpush1.msra.mxu0 0.0
    %406 = vmatprep.subr.mxu0 0.0
    %407 = vmatpush1.msra.mxu0 0.0
    %408 = vmatprep.subr.mxu0 0.0
    %409 = vmatpush1.msra.mxu0 0.0
    %410 = vmatprep.subr.mxu0 0.0
    %411 = vmatpush1.msra.mxu0 0.0
    %412 = vmatprep.subr.mxu0 0.0
    %413 = vmatpush1.msra.mxu0 0.0
    %414 = vmatprep.subr.mxu0 0.0
    %415 = vmatpush1.msra.mxu0 0.0
    %416 = vmatprep.subr.mxu0 0.0
    %417 = vmatpush1.msra.mxu0 0.0
    %418 = vmatprep.subr.mxu0 0.0
    %419 = vmatpush1.msra.mxu0 0.0
    %420 = vmatprep.subr.mxu0 0.0
    %421 = vmatpush1.msra.mxu0 0.0
    %422 = vmatprep.subr.mxu0 0.0
    %423 = vmatpush1.msra.mxu0 0.0
    %424 = vmatprep.subr.mxu0 0.0
    %425 = vmatpush1.msra.mxu0 0.0
    %426 = vmatprep.subr.mxu0 0.0
    %427 = vmatpush1.msra.mxu0 0.0
    %428 = vmatprep.mubr.f32.mxu0 0.0
    %429 = vmatmul.mubr.f32.gmra.mrb[0].mxu0 %v337
    %v430 = vpop.f32.mrb[0].mxu0
    %v431 = vadd.f32 0.0, %v430
    %v432 = vpop.f32.mrb[0].mxu0
    %433 = vmatprep.mubr.f32.mxu0 0.0
    %434 = vmatmul.mubr.f32.gmra.mrb[0].mxu0 %v340
    %v435 = vpop.f32.mrb[0].mxu0
    %v436 = vadd.f32 0.0, %v435
    %v437 = vpop.f32.mrb[0].mxu0
    %438 = vmatprep.mubr.f32.mxu0 0.0
    %439 = vmatmul.mubr.f32.gmra.mrb[0].mxu0 %v343
    %v440 = vpop.f32.mrb[0].mxu0
    %v441 = vadd.f32 0.0, %v440
    %v442 = vpop.f32.mrb[0].mxu0
    %443 = vmatprep.mubr.f32.mxu0 0.0
    %444 = vmatmul.mubr.f32.gmra.mrb[0].mxu0 %v346
    %v445 = vpop.f32.mrb[0].mxu0
    %v446 = vadd.f32 0.0, %v445
    %v447 = vpop.f32.mrb[0].mxu0
    %448 = vmatprep.mubr.f32.mxu0 0.0
    %449 = vmatmul.mubr.f32.gmra.mrb[0].mxu0 %v349
    %v450 = vpop.f32.mrb[0].mxu0
    %v451 = vadd.f32 0.0, %v450
    %v452 = vpop.f32.mrb[0].mxu0
    %453 = vmatprep.mubr.f32.mxu0 0.0
    %454 = vmatmul.mubr.f32.gmra.mrb[0].mxu0 %v352
    %v455 = vpop.f32.mrb[0].mxu0
    %v456 = vadd.f32 0.0, %v455
    %v457 = vpop.f32.mrb[0].mxu0
    %458 = vmatprep.mubr.f32.mxu0 0.0
    %459 = vmatmul.mubr.f32.gmra.mrb[0].mxu0 %v355
    %v460 = vpop.f32.mrb[0].mxu0
    %v461 = vadd.f32 0.0, %v460
    %v462 = vpop.f32.mrb[0].mxu0
    %463 = vmatprep.mubr.f32.mxu0 0.0
    %464 = vmatmul.mubr.f32.gmra.mrb[0].mxu0 %v358
    %v465 = vpop.f32.mrb[0].mxu0
    %v466 = vadd.f32 0.0, %v465
    %v467 = vpop.f32.mrb[0].mxu0
    %468 = vdwg.mxu0
    %v469 = vld [vmem:[%s6] sm:$0x1]
    %v471 = vlaneseq
    %v472 = vshrl.u32 %v471, 7
    %v473 = vsub.s32 0, %v472
    %v474 = vrot.slane %v469, %v473
    %475 = vrot.lane.b32.xlu0 %v474, 64
    %v476 = vpop.permute.xlu0 %475
    %v478 = vadd.f32 %v431, %v476
    %v479 = vadd.f32 %v436, %v476
    %v480 = vadd.f32 %v441, %v476
    %v481 = vadd.f32 %v446, %v476
    %v482 = vadd.f32 %v451, %v476
    %v483 = vadd.f32 %v456, %v476
    %v484 = vadd.f32 %v461, %v476
    %v485 = vadd.f32 %v466, %v476
    %v486 = vsub.f32 0.0, %v478
    %v487 = vsub.f32 0.0, %v479
    %v488 = vsub.f32 0.0, %v480
    %v489 = vsub.f32 0.0, %v481
    %v490 = vsub.f32 0.0, %v482
    %v491 = vsub.f32 0.0, %v483
    %v492 = vsub.f32 0.0, %v484
    %v493 = vsub.f32 0.0, %v485
    %v494 = vmul.f32 %v486, 1.442695
    %v495 = vpow.pop %v494
    %v496 = vmul.f32 %v487, 1.442695
    %v497 = vpow.pop %v496
    %v498 = vmul.f32 %v488, 1.442695
    %v499 = vpow.pop %v498
    %v500 = vmul.f32 %v489, 1.442695
    %v501 = vpow.pop %v500
    %v502 = vmul.f32 %v490, 1.442695
    %v503 = vpow.pop %v502
    %v504 = vmul.f32 %v491, 1.442695
    %v505 = vpow.pop %v504
    %v506 = vmul.f32 %v492, 1.442695
    %v507 = vpow.pop %v506
    %v508 = vmul.f32 %v493, 1.442695
    %v509 = vpow.pop %v508
    %v510 = vadd.f32 %v495, 1.0
    %v511 = vadd.f32 %v497, 1.0
    %v512 = vadd.f32 %v499, 1.0
    %v513 = vadd.f32 %v501, 1.0
    %v514 = vadd.f32 %v503, 1.0
    %v515 = vadd.f32 %v505, 1.0
    %v516 = vadd.f32 %v507, 1.0
    %v517 = vadd.f32 %v509, 1.0
    %v518 = vrcp.pop %v510
    %v519 = vmul.f32 1.0, %v518
    %v520 = vrcp.pop %v511
    %v521 = vmul.f32 1.0, %v520
    %v522 = vrcp.pop %v512
    %v523 = vmul.f32 1.0, %v522
    %v524 = vrcp.pop %v513
    %v525 = vmul.f32 1.0, %v524
    %v526 = vrcp.pop %v514
    %v527 = vmul.f32 1.0, %v526
    %v528 = vrcp.pop %v515
    %v529 = vmul.f32 1.0, %v528
    %v530 = vrcp.pop %v516
    %v531 = vmul.f32 1.0, %v530
    %v532 = vrcp.pop %v517
    %v533 = vmul.f32 1.0, %v532
    %v534 = vmul.f32 %v478, %v519
    %v535 = vmul.f32 %v479, %v521
    %v536 = vmul.f32 %v480, %v523
    %v537 = vmul.f32 %v481, %v525
    %v538 = vmul.f32 %v482, %v527
    %v539 = vmul.f32 %v483, %v529
    %v540 = vmul.f32 %v484, %v531
    %v541 = vmul.f32 %v485, %v533
    %v542 = vld [vmem:[%s7] sm:$0xff]
    %v543 = vld [vmem:[%s7 + $0x8] sm:$0xff]
    %v544 = vld [vmem:[%s8] sm:$0x1]
    %v546 = vlaneseq
    %v547 = vshrl.u32 %v546, 7
    %v548 = vsub.s32 0, %v547
    %v549 = vrot.slane %v544, %v548
    %559 = vrot.lane.b32.xlu0 %v534, 64
    %v560 = vpop.permute.xlu0 %559
    %561 = vrot.lane.b32.xlu0 %v535, 64
    %v562 = vpop.permute.xlu0 %561
    %563 = vrot.lane.b32.xlu0 %v536, 64
    %v564 = vpop.permute.xlu0 %563
    %565 = vrot.lane.b32.xlu0 %v537, 64
    %v566 = vpop.permute.xlu0 %565
    %567 = vrot.lane.b32.xlu0 %v538, 64
    %v568 = vpop.permute.xlu0 %567
    %569 = vrot.lane.b32.xlu0 %v539, 64
    %v570 = vpop.permute.xlu0 %569
    %571 = vrot.lane.b32.xlu0 %v540, 64
    %v572 = vpop.permute.xlu0 %571
    %573 = vrot.lane.b32.xlu0 %v541, 64
    %v574 = vpop.permute.xlu0 %573
    %v575 = vsel %vm195, %v560, 0
    %v577 = vsel %vm195, %v562, 0
    %v579 = vsel %vm195, %v564, 0
    %v581 = vsel %vm195, %v566, 0
    %v583 = vsel %vm195, %v568, 0
    %v585 = vsel %vm195, %v570, 0
    %v587 = vsel %vm195, %v572, 0
    %v589 = vsel %vm195, %v574, 0
    %591 = vmatprep.subr.mxu0 0.0
    %592 = vmatpush1.msra.mxu0 %v542
    %593 = vmatprep.subr.mxu0 0.0
    %594 = vmatpush1.msra.mxu0 %v543
    %595 = vmatprep.subr.mxu0 0.0
    %596 = vmatpush1.msra.mxu0 0.0
    %597 = vmatprep.subr.mxu0 0.0
    %598 = vmatpush1.msra.mxu0 0.0
    %599 = vmatprep.subr.mxu0 0.0
    %600 = vmatpush1.msra.mxu0 0.0
    %601 = vmatprep.subr.mxu0 0.0
    %602 = vmatpush1.msra.mxu0 0.0
    %603 = vmatprep.subr.mxu0 0.0
    %604 = vmatpush1.msra.mxu0 0.0
    %605 = vmatprep.subr.mxu0 0.0
    %606 = vmatpush1.msra.mxu0 0.0
    %607 = vmatprep.subr.mxu0 0.0
    %608 = vmatpush1.msra.mxu0 0.0
    %609 = vmatprep.subr.mxu0 0.0
    %610 = vmatpush1.msra.mxu0 0.0
    %611 = vmatprep.subr.mxu0 0.0
    %612 = vmatpush1.msra.mxu0 0.0
    %613 = vmatprep.subr.mxu0 0.0
    %614 = vmatpush1.msra.mxu0 0.0
    %615 = vmatprep.subr.mxu0 0.0
    %616 = vmatpush1.msra.mxu0 0.0
    %617 = vmatprep.subr.mxu0 0.0
    %618 = vmatpush1.msra.mxu0 0.0
    %619 = vmatprep.subr.mxu0 0.0
    %620 = vmatpush1.msra.mxu0 0.0
    %621 = vmatprep.subr.mxu0 0.0
    %622 = vmatpush1.msra.mxu0 0.0
    %623 = vmatprep.subr.mxu0 0.0
    %624 = vmatpush1.msra.mxu0 0.0
    %625 = vmatprep.subr.mxu0 0.0
    %626 = vmatpush1.msra.mxu0 0.0
    %627 = vmatprep.subr.mxu0 0.0
    %628 = vmatpush1.msra.mxu0 0.0
    %629 = vmatprep.subr.mxu0 0.0
    %630 = vmatpush1.msra.mxu0 0.0
    %631 = vmatprep.subr.mxu0 0.0
    %632 = vmatpush1.msra.mxu0 0.0
    %633 = vmatprep.subr.mxu0 0.0
    %634 = vmatpush1.msra.mxu0 0.0
    %635 = vmatprep.subr.mxu0 0.0
    %636 = vmatpush1.msra.mxu0 0.0
    %637 = vmatprep.subr.mxu0 0.0
    %638 = vmatpush1.msra.mxu0 0.0
    %639 = vmatprep.subr.mxu0 0.0
    %640 = vmatpush1.msra.mxu0 0.0
    %641 = vmatprep.subr.mxu0 0.0
    %642 = vmatpush1.msra.mxu0 0.0
    %643 = vmatprep.subr.mxu0 0.0
    %644 = vmatpush1.msra.mxu0 0.0
    %645 = vmatprep.subr.mxu0 0.0
    %646 = vmatpush1.msra.mxu0 0.0
    %647 = vmatprep.subr.mxu0 0.0
    %648 = vmatpush1.msra.mxu0 0.0
    %649 = vmatprep.subr.mxu0 0.0
    %650 = vmatpush1.msra.mxu0 0.0
    %651 = vmatprep.subr.mxu0 0.0
    %652 = vmatpush1.msra.mxu0 0.0
    %653 = vmatprep.subr.mxu0 0.0
    %654 = vmatpush1.msra.mxu0 0.0
    %655 = vmatprep.mubr.f32.mxu0 0.0
    %656 = vmatmul.mubr.f32.gmra.mrb[0].mxu0 %v575
    %v657 = vpop.f32.mrb[0].mxu0
    %v658 = vadd.f32 %v549, %v657
    %v659 = vpop.f32.mrb[0].mxu0
    %660 = vmatprep.mubr.f32.mxu0 0.0
    %661 = vmatmul.mubr.f32.gmra.mrb[0].mxu0 %v577
    %v662 = vpop.f32.mrb[0].mxu0
    %v663 = vadd.f32 %v549, %v662
    %v664 = vpop.f32.mrb[0].mxu0
    %665 = vmatprep.mubr.f32.mxu0 0.0
    %666 = vmatmul.mubr.f32.gmra.mrb[0].mxu0 %v579
    %v667 = vpop.f32.mrb[0].mxu0
    %v668 = vadd.f32 %v549, %v667
    %v669 = vpop.f32.mrb[0].mxu0
    %670 = vmatprep.mubr.f32.mxu0 0.0
    %671 = vmatmul.mubr.f32.gmra.mrb[0].mxu0 %v581
    %v672 = vpop.f32.mrb[0].mxu0
    %v673 = vadd.f32 %v549, %v672
    %v674 = vpop.f32.mrb[0].mxu0
    %675 = vmatprep.mubr.f32.mxu0 0.0
    %676 = vmatmul.mubr.f32.gmra.mrb[0].mxu0 %v583
    %v677 = vpop.f32.mrb[0].mxu0
    %v678 = vadd.f32 %v549, %v677
    %v679 = vpop.f32.mrb[0].mxu0
    %680 = vmatprep.mubr.f32.mxu0 0.0
    %681 = vmatmul.mubr.f32.gmra.mrb[0].mxu0 %v585
    %v682 = vpop.f32.mrb[0].mxu0
    %v683 = vadd.f32 %v549, %v682
    %v684 = vpop.f32.mrb[0].mxu0
    %685 = vmatprep.mubr.f32.mxu0 0.0
    %686 = vmatmul.mubr.f32.gmra.mrb[0].mxu0 %v587
    %v687 = vpop.f32.mrb[0].mxu0
    %v688 = vadd.f32 %v549, %v687
    %v689 = vpop.f32.mrb[0].mxu0
    %690 = vmatprep.mubr.f32.mxu0 0.0
    %691 = vmatmul.mubr.f32.gmra.mrb[0].mxu0 %v589
    %v692 = vpop.f32.mrb[0].mxu0
    %v693 = vadd.f32 %v549, %v692
    %v694 = vpop.f32.mrb[0].mxu0
    %695 = vdwg.mxu0
    %v696 = vmul.f32 %v287, %v431
    %v697 = vmul.f32 %v292, %v436
    %v698 = vmul.f32 %v297, %v441
    %v699 = vmul.f32 %v302, %v446
    %v700 = vmul.f32 %v307, %v451
    %v701 = vmul.f32 %v312, %v456
    %v702 = vmul.f32 %v317, %v461
    %v703 = vmul.f32 %v322, %v466
    %v704 = vmul.f32 %v658, %v696
    %v705 = vmul.f32 %v663, %v697
    %v706 = vmul.f32 %v668, %v698
    %v707 = vmul.f32 %v673, %v699
    %v708 = vmul.f32 %v678, %v700
    %v709 = vmul.f32 %v683, %v701
    %v710 = vmul.f32 %v688, %v702
    %v711 = vmul.f32 %v693, %v703
    %720 = vrot.lane.b32.xlu0 %v431, 8
    %v721 = vpop.permute.xlu0 %720
    %722 = vrot.lane.b32.xlu0 %v436, 8
    %v723 = vpop.permute.xlu0 %722
    %724 = vrot.lane.b32.xlu0 %v441, 8
    %v725 = vpop.permute.xlu0 %724
    %726 = vrot.lane.b32.xlu0 %v446, 8
    %v727 = vpop.permute.xlu0 %726
    %728 = vrot.lane.b32.xlu0 %v451, 8
    %v729 = vpop.permute.xlu0 %728
    %730 = vrot.lane.b32.xlu0 %v456, 8
    %v731 = vpop.permute.xlu0 %730
    %732 = vrot.lane.b32.xlu0 %v461, 8
    %v733 = vpop.permute.xlu0 %732
    %734 = vrot.lane.b32.xlu0 %v466, 8
    %v735 = vpop.permute.xlu0 %734
    %v744 = vmul.f32 %v287, %v721
    %v745 = vmul.f32 %v292, %v723
    %v746 = vmul.f32 %v297, %v725
    %v747 = vmul.f32 %v302, %v727
    %v748 = vmul.f32 %v307, %v729
    %v749 = vmul.f32 %v312, %v731
    %v750 = vmul.f32 %v317, %v733
    %v751 = vmul.f32 %v322, %v735
    %760 = vrot.lane.b32.xlu0 %v744, 112
    %v761 = vpop.permute.xlu0 %760
    %762 = vrot.lane.b32.xlu0 %v745, 112
    %v763 = vpop.permute.xlu0 %762
    %764 = vrot.lane.b32.xlu0 %v746, 112
    %v765 = vpop.permute.xlu0 %764
    %766 = vrot.lane.b32.xlu0 %v747, 112
    %v767 = vpop.permute.xlu0 %766
    %768 = vrot.lane.b32.xlu0 %v748, 112
    %v769 = vpop.permute.xlu0 %768
    %770 = vrot.lane.b32.xlu0 %v749, 112
    %v771 = vpop.permute.xlu0 %770
    %772 = vrot.lane.b32.xlu0 %v750, 112
    %v773 = vpop.permute.xlu0 %772
    %774 = vrot.lane.b32.xlu0 %v751, 112
    %v775 = vpop.permute.xlu0 %774
    %v784 = vadd.f32 %v744, %v761
    %v785 = vadd.f32 %v745, %v763
    %v786 = vadd.f32 %v746, %v765
    %v787 = vadd.f32 %v747, %v767
    %v788 = vadd.f32 %v748, %v769
    %v789 = vadd.f32 %v749, %v771
    %v790 = vadd.f32 %v750, %v773
    %v791 = vadd.f32 %v751, %v775
    %792 = vrot.lane.b32.xlu0 %v744, 96
    %v793 = vpop.permute.xlu0 %792
    %794 = vrot.lane.b32.xlu0 %v745, 96
    %v795 = vpop.permute.xlu0 %794
    %796 = vrot.lane.b32.xlu0 %v746, 96
    %v797 = vpop.permute.xlu0 %796
    %798 = vrot.lane.b32.xlu0 %v747, 96
    %v799 = vpop.permute.xlu0 %798
    %800 = vrot.lane.b32.xlu0 %v748, 96
    %v801 = vpop.permute.xlu0 %800
    %802 = vrot.lane.b32.xlu0 %v749, 96
    %v803 = vpop.permute.xlu0 %802
    %804 = vrot.lane.b32.xlu0 %v750, 96
    %v805 = vpop.permute.xlu0 %804
    %806 = vrot.lane.b32.xlu0 %v751, 96
    %v807 = vpop.permute.xlu0 %806
    %v816 = vadd.f32 %v784, %v793
    %v817 = vadd.f32 %v785, %v795
    %v818 = vadd.f32 %v786, %v797
    %v819 = vadd.f32 %v787, %v799
    %v820 = vadd.f32 %v788, %v801
    %v821 = vadd.f32 %v789, %v803
    %v822 = vadd.f32 %v790, %v805
    %v823 = vadd.f32 %v791, %v807
    %832 = vrot.lane.b32.xlu0 %v816, 112
    %v833 = vpop.permute.xlu0 %832
    %834 = vrot.lane.b32.xlu0 %v817, 112
    %v835 = vpop.permute.xlu0 %834
    %836 = vrot.lane.b32.xlu0 %v818, 112
    %v837 = vpop.permute.xlu0 %836
    %838 = vrot.lane.b32.xlu0 %v819, 112
    %v839 = vpop.permute.xlu0 %838
    %840 = vrot.lane.b32.xlu0 %v820, 112
    %v841 = vpop.permute.xlu0 %840
    %842 = vrot.lane.b32.xlu0 %v821, 112
    %v843 = vpop.permute.xlu0 %842
    %844 = vrot.lane.b32.xlu0 %v822, 112
    %v845 = vpop.permute.xlu0 %844
    %846 = vrot.lane.b32.xlu0 %v823, 112
    %v847 = vpop.permute.xlu0 %846
    %v856 = vmul.f32 %v658, %v833
    %v857 = vmul.f32 %v663, %v835
    %v858 = vmul.f32 %v668, %v837
    %v859 = vmul.f32 %v673, %v839
    %v860 = vmul.f32 %v678, %v841
    %v861 = vmul.f32 %v683, %v843
    %v862 = vmul.f32 %v688, %v845
    %v863 = vmul.f32 %v693, %v847
    %v864 = vld [vmem:[%s10] sm:$0xff]
    %873 = vrot.lane.b32.xlu0 %v856, 120
    %v874 = vpop.permute.xlu0 %873
    %875 = vrot.lane.b32.xlu0 %v857, 120
    %v876 = vpop.permute.xlu0 %875
    %877 = vrot.lane.b32.xlu0 %v858, 120
    %v878 = vpop.permute.xlu0 %877
    %879 = vrot.lane.b32.xlu0 %v859, 120
    %v880 = vpop.permute.xlu0 %879
    %881 = vrot.lane.b32.xlu0 %v860, 120
    %v882 = vpop.permute.xlu0 %881
    %883 = vrot.lane.b32.xlu0 %v861, 120
    %v884 = vpop.permute.xlu0 %883
    %885 = vrot.lane.b32.xlu0 %v862, 120
    %v886 = vpop.permute.xlu0 %885
    %887 = vrot.lane.b32.xlu0 %v863, 120
    %v888 = vpop.permute.xlu0 %887
    %vm889 = vcmask 64512
    %v890 = vsel %vm889, %v874, 0
    %v892 = vsel %vm889, %v876, 0
    %v894 = vsel %vm889, %v878, 0
    %v896 = vsel %vm889, %v880, 0
    %v898 = vsel %vm889, %v882, 0
    %v900 = vsel %vm889, %v884, 0
    %v902 = vsel %vm889, %v886, 0
    %v904 = vsel %vm889, %v888, 0
    %906 = vmatprep.subr.mxu0 0.0
    %907 = vmatpush1.msra.mxu0 %v864
    %908 = vmatprep.subr.mxu0 0.0
    %909 = vmatpush1.msra.mxu0 0.0
    %910 = vmatprep.subr.mxu0 0.0
    %911 = vmatpush1.msra.mxu0 0.0
    %912 = vmatprep.subr.mxu0 0.0
    %913 = vmatpush1.msra.mxu0 0.0
    %914 = vmatprep.subr.mxu0 0.0
    %915 = vmatpush1.msra.mxu0 0.0
    %916 = vmatprep.subr.mxu0 0.0
    %917 = vmatpush1.msra.mxu0 0.0
    %918 = vmatprep.subr.mxu0 0.0
    %919 = vmatpush1.msra.mxu0 0.0
    %920 = vmatprep.subr.mxu0 0.0
    %921 = vmatpush1.msra.mxu0 0.0
    %922 = vmatprep.subr.mxu0 0.0
    %923 = vmatpush1.msra.mxu0 0.0
    %924 = vmatprep.subr.mxu0 0.0
    %925 = vmatpush1.msra.mxu0 0.0
    %926 = vmatprep.subr.mxu0 0.0
    %927 = vmatpush1.msra.mxu0 0.0
    %928 = vmatprep.subr.mxu0 0.0
    %929 = vmatpush1.msra.mxu0 0.0
    %930 = vmatprep.subr.mxu0 0.0
    %931 = vmatpush1.msra.mxu0 0.0
    %932 = vmatprep.subr.mxu0 0.0
    %933 = vmatpush1.msra.mxu0 0.0
    %934 = vmatprep.subr.mxu0 0.0
    %935 = vmatpush1.msra.mxu0 0.0
    %936 = vmatprep.subr.mxu0 0.0
    %937 = vmatpush1.msra.mxu0 0.0
    %938 = vmatprep.subr.mxu0 0.0
    %939 = vmatpush1.msra.mxu0 0.0
    %940 = vmatprep.subr.mxu0 0.0
    %941 = vmatpush1.msra.mxu0 0.0
    %942 = vmatprep.subr.mxu0 0.0
    %943 = vmatpush1.msra.mxu0 0.0
    %944 = vmatprep.subr.mxu0 0.0
    %945 = vmatpush1.msra.mxu0 0.0
    %946 = vmatprep.subr.mxu0 0.0
    %947 = vmatpush1.msra.mxu0 0.0
    %948 = vmatprep.subr.mxu0 0.0
    %949 = vmatpush1.msra.mxu0 0.0
    %950 = vmatprep.subr.mxu0 0.0
    %951 = vmatpush1.msra.mxu0 0.0
    %952 = vmatprep.subr.mxu0 0.0
    %953 = vmatpush1.msra.mxu0 0.0
    %954 = vmatprep.subr.mxu0 0.0
    %955 = vmatpush1.msra.mxu0 0.0
    %956 = vmatprep.subr.mxu0 0.0
    %957 = vmatpush1.msra.mxu0 0.0
    %958 = vmatprep.subr.mxu0 0.0
    %959 = vmatpush1.msra.mxu0 0.0
    %960 = vmatprep.subr.mxu0 0.0
    %961 = vmatpush1.msra.mxu0 0.0
    %962 = vmatprep.subr.mxu0 0.0
    %963 = vmatpush1.msra.mxu0 0.0
    %964 = vmatprep.subr.mxu0 0.0
    %965 = vmatpush1.msra.mxu0 0.0
    %966 = vmatprep.subr.mxu0 0.0
    %967 = vmatpush1.msra.mxu0 0.0
    %968 = vmatprep.subr.mxu0 0.0
    %969 = vmatpush1.msra.mxu0 0.0
    %970 = vmatprep.mubr.f32.mxu0 0.0
    %971 = vmatmul.mubr.f32.gmra.mrb[0].mxu0 %v890
    %v972 = vpop.f32.mrb[0].mxu0
    %v973 = vadd.f32 0.0, %v972
    %v974 = vpop.f32.mrb[0].mxu0
    %975 = vmatprep.mubr.f32.mxu0 0.0
    %976 = vmatmul.mubr.f32.gmra.mrb[0].mxu0 %v892
    %v977 = vpop.f32.mrb[0].mxu0
    %v978 = vadd.f32 0.0, %v977
    %v979 = vpop.f32.mrb[0].mxu0
    %980 = vmatprep.mubr.f32.mxu0 0.0
    %981 = vmatmul.mubr.f32.gmra.mrb[0].mxu0 %v894
    %v982 = vpop.f32.mrb[0].mxu0
    %v983 = vadd.f32 0.0, %v982
    %v984 = vpop.f32.mrb[0].mxu0
    %985 = vmatprep.mubr.f32.mxu0 0.0
    %986 = vmatmul.mubr.f32.gmra.mrb[0].mxu0 %v896
    %v987 = vpop.f32.mrb[0].mxu0
    %v988 = vadd.f32 0.0, %v987
    %v989 = vpop.f32.mrb[0].mxu0
    %990 = vmatprep.mubr.f32.mxu0 0.0
    %991 = vmatmul.mubr.f32.gmra.mrb[0].mxu0 %v898
    %v992 = vpop.f32.mrb[0].mxu0
    %v993 = vadd.f32 0.0, %v992
    %v994 = vpop.f32.mrb[0].mxu0
    %995 = vmatprep.mubr.f32.mxu0 0.0
    %996 = vmatmul.mubr.f32.gmra.mrb[0].mxu0 %v900
    %v997 = vpop.f32.mrb[0].mxu0
    %v998 = vadd.f32 0.0, %v997
    %v999 = vpop.f32.mrb[0].mxu0
    %1000 = vmatprep.mubr.f32.mxu0 0.0
    %1001 = vmatmul.mubr.f32.gmra.mrb[0].mxu0 %v902
    %v1002 = vpop.f32.mrb[0].mxu0
    %v1003 = vadd.f32 0.0, %v1002
    %v1004 = vpop.f32.mrb[0].mxu0
    %1005 = vmatprep.mubr.f32.mxu0 0.0
    %1006 = vmatmul.mubr.f32.gmra.mrb[0].mxu0 %v904
    %v1007 = vpop.f32.mrb[0].mxu0
    %v1008 = vadd.f32 0.0, %v1007
    %v1009 = vpop.f32.mrb[0].mxu0
    %1010 = vdwg.mxu0
    %v1011 = vadd.f32 %v704, %v973
    %v1012 = vadd.f32 %v705, %v978
    %v1013 = vadd.f32 %v706, %v983
    %v1014 = vadd.f32 %v707, %v988
    %v1015 = vadd.f32 %v708, %v993
    %v1016 = vadd.f32 %v709, %v998
    %v1017 = vadd.f32 %v710, %v1003
    %v1018 = vadd.f32 %v711, %v1008
    %vm1019 = vcmask 523264
    %v1021 = vsel %vm1019, %v107, 0
    %v1024 = vsel %vm1019, %v108, 0
    %1026 = vmatprep.subr.mxu0 0.0
    %1027 = vmatpush1.msra.mxu0 %v1011
    %1028 = vmatprep.subr.mxu0 0.0
    %1029 = vmatpush1.msra.mxu0 %v1012
    %1030 = vmatprep.subr.mxu0 0.0
    %1031 = vmatpush1.msra.mxu0 %v1013
    %1032 = vmatprep.subr.mxu0 0.0
    %1033 = vmatpush1.msra.mxu0 %v1014
    %1034 = vmatprep.subr.mxu0 0.0
    %1035 = vmatpush1.msra.mxu0 %v1015
    %1036 = vmatprep.subr.mxu0 0.0
    %1037 = vmatpush1.msra.mxu0 %v1016
    %1038 = vmatprep.subr.mxu0 0.0
    %1039 = vmatpush1.msra.mxu0 %v1017
    %1040 = vmatprep.subr.mxu0 0.0
    %1041 = vmatpush1.msra.mxu0 %v1018
    %1042 = vmatprep.subr.mxu0 0.0
    %1043 = vmatpush1.msra.mxu0 0.0
    %1044 = vmatprep.subr.mxu0 0.0
    %1045 = vmatpush1.msra.mxu0 0.0
    %1046 = vmatprep.subr.mxu0 0.0
    %1047 = vmatpush1.msra.mxu0 0.0
    %1048 = vmatprep.subr.mxu0 0.0
    %1049 = vmatpush1.msra.mxu0 0.0
    %1050 = vmatprep.subr.mxu0 0.0
    %1051 = vmatpush1.msra.mxu0 0.0
    %1052 = vmatprep.subr.mxu0 0.0
    %1053 = vmatpush1.msra.mxu0 0.0
    %1054 = vmatprep.subr.mxu0 0.0
    %1055 = vmatpush1.msra.mxu0 0.0
    %1056 = vmatprep.subr.mxu0 0.0
    %1057 = vmatpush1.msra.mxu0 0.0
    %1058 = vmatprep.subr.mxu0 0.0
    %1059 = vmatpush1.msra.mxu0 0.0
    %1060 = vmatprep.subr.mxu0 0.0
    %1061 = vmatpush1.msra.mxu0 0.0
    %1062 = vmatprep.subr.mxu0 0.0
    %1063 = vmatpush1.msra.mxu0 0.0
    %1064 = vmatprep.subr.mxu0 0.0
    %1065 = vmatpush1.msra.mxu0 0.0
    %1066 = vmatprep.subr.mxu0 0.0
    %1067 = vmatpush1.msra.mxu0 0.0
    %1068 = vmatprep.subr.mxu0 0.0
    %1069 = vmatpush1.msra.mxu0 0.0
    %1070 = vmatprep.subr.mxu0 0.0
    %1071 = vmatpush1.msra.mxu0 0.0
    %1072 = vmatprep.subr.mxu0 0.0
    %1073 = vmatpush1.msra.mxu0 0.0
    %1074 = vmatprep.subr.mxu0 0.0
    %1075 = vmatpush1.msra.mxu0 0.0
    %1076 = vmatprep.subr.mxu0 0.0
    %1077 = vmatpush1.msra.mxu0 0.0
    %1078 = vmatprep.subr.mxu0 0.0
    %1079 = vmatpush1.msra.mxu0 0.0
    %1080 = vmatprep.subr.mxu0 0.0
    %1081 = vmatpush1.msra.mxu0 0.0
    %1082 = vmatprep.subr.mxu0 0.0
    %1083 = vmatpush1.msra.mxu0 0.0
    %1084 = vmatprep.subr.mxu0 0.0
    %1085 = vmatpush1.msra.mxu0 0.0
    %1086 = vmatprep.subr.mxu0 0.0
    %1087 = vmatpush1.msra.mxu0 0.0
    %1088 = vmatprep.subr.mxu0 0.0
    %1089 = vmatpush1.msra.mxu0 0.0
    %1090 = vmatprep.mubr.f32.mxu0 0.0
    %1091 = vmatmul.mubr.f32.gmra.mrb[0].mxu0 %v1021
    %v1092 = vpop.f32.mrb[0].mxu0
    %v1093 = vadd.f32 0.0, %v1092
    %v1094 = vpop.f32.mrb[0].mxu0
    %1095 = vmatprep.mubr.f32.mxu0 0.0
    %1096 = vmatmul.mubr.f32.gmra.mrb[0].mxu0 %v1024
    %v1097 = vpop.f32.mrb[0].mxu0
    %v1098 = vadd.f32 0.0, %v1097
    %v1099 = vpop.f32.mrb[0].mxu0
    %1100 = vdwg.mxu0
    %v1101 = vld [vmem:[%s3] sm:$0xff]
    %v1102 = vld [vmem:[%s3 + $0x8] sm:$0xff]
    %v1103 = vld [vmem:[%s11] sm:$0xf]
    %vm1104 = vcmask 31744
    %v1106 = vsel %vm1104, %v1101, 0
    %v1109 = vsel %vm1104, %v1102, 0
    %v1112 = vsel %vm360, %v1103, 0
    %1114 = vmatprep.subr.mxu0 0.0
    %1115 = vmatpush1.msra.mxu0 %v1112
    %1116 = vmatprep.subr.mxu0 0.0
    %1117 = vmatpush1.msra.mxu0 0.0
    %1118 = vmatprep.subr.mxu0 0.0
    %1119 = vmatpush1.msra.mxu0 0.0
    %1120 = vmatprep.subr.mxu0 0.0
    %1121 = vmatpush1.msra.mxu0 0.0
    %1122 = vmatprep.subr.mxu0 0.0
    %1123 = vmatpush1.msra.mxu0 0.0
    %1124 = vmatprep.subr.mxu0 0.0
    %1125 = vmatpush1.msra.mxu0 0.0
    %1126 = vmatprep.subr.mxu0 0.0
    %1127 = vmatpush1.msra.mxu0 0.0
    %1128 = vmatprep.subr.mxu0 0.0
    %1129 = vmatpush1.msra.mxu0 0.0
    %1130 = vmatprep.subr.mxu0 0.0
    %1131 = vmatpush1.msra.mxu0 0.0
    %1132 = vmatprep.subr.mxu0 0.0
    %1133 = vmatpush1.msra.mxu0 0.0
    %1134 = vmatprep.subr.mxu0 0.0
    %1135 = vmatpush1.msra.mxu0 0.0
    %1136 = vmatprep.subr.mxu0 0.0
    %1137 = vmatpush1.msra.mxu0 0.0
    %1138 = vmatprep.subr.mxu0 0.0
    %1139 = vmatpush1.msra.mxu0 0.0
    %1140 = vmatprep.subr.mxu0 0.0
    %1141 = vmatpush1.msra.mxu0 0.0
    %1142 = vmatprep.subr.mxu0 0.0
    %1143 = vmatpush1.msra.mxu0 0.0
    %1144 = vmatprep.subr.mxu0 0.0
    %1145 = vmatpush1.msra.mxu0 0.0
    %1146 = vmatprep.subr.mxu0 0.0
    %1147 = vmatpush1.msra.mxu0 0.0
    %1148 = vmatprep.subr.mxu0 0.0
    %1149 = vmatpush1.msra.mxu0 0.0
    %1150 = vmatprep.subr.mxu0 0.0
    %1151 = vmatpush1.msra.mxu0 0.0
    %1152 = vmatprep.subr.mxu0 0.0
    %1153 = vmatpush1.msra.mxu0 0.0
    %1154 = vmatprep.subr.mxu0 0.0
    %1155 = vmatpush1.msra.mxu0 0.0
    %1156 = vmatprep.subr.mxu0 0.0
    %1157 = vmatpush1.msra.mxu0 0.0
    %1158 = vmatprep.subr.mxu0 0.0
    %1159 = vmatpush1.msra.mxu0 0.0
    %1160 = vmatprep.subr.mxu0 0.0
    %1161 = vmatpush1.msra.mxu0 0.0
    %1162 = vmatprep.subr.mxu0 0.0
    %1163 = vmatpush1.msra.mxu0 0.0
    %1164 = vmatprep.subr.mxu0 0.0
    %1165 = vmatpush1.msra.mxu0 0.0
    %1166 = vmatprep.subr.mxu0 0.0
    %1167 = vmatpush1.msra.mxu0 0.0
    %1168 = vmatprep.subr.mxu0 0.0
    %1169 = vmatpush1.msra.mxu0 0.0
    %1170 = vmatprep.subr.mxu0 0.0
    %1171 = vmatpush1.msra.mxu0 0.0
    %1172 = vmatprep.subr.mxu0 0.0
    %1173 = vmatpush1.msra.mxu0 0.0
    %1174 = vmatprep.subr.mxu0 0.0
    %1175 = vmatpush1.msra.mxu0 0.0
    %1176 = vmatprep.subr.mxu0 0.0
    %1177 = vmatpush1.msra.mxu0 0.0
    %1178 = vmatprep.mubr.f32.mxu0 0.0
    %1179 = vmatmul.mubr.f32.gmra.mrb[0].mxu0 %v1106
    %v1180 = vpop.f32.mrb[0].mxu0
    %v1181 = vadd.f32 0.0, %v1180
    %v1182 = vpop.f32.mrb[0].mxu0
    %1183 = vmatprep.mubr.f32.mxu0 0.0
    %1184 = vmatmul.mubr.f32.gmra.mrb[0].mxu0 %v1109
    %v1185 = vpop.f32.mrb[0].mxu0
    %v1186 = vadd.f32 0.0, %v1185
    %v1187 = vpop.f32.mrb[0].mxu0
    %1188 = vdwg.mxu0
    %1189 = vrot.lane.b32.xlu0 %v45, 32
    %v1190 = vpop.permute.xlu0 %1189
    %1191 = vrot.lane.b32.xlu0 %v46, 32
    %v1192 = vpop.permute.xlu0 %1191
    %1195 = vrot.lane.b32.xlu0 %v45, 64
    %v1196 = vpop.permute.xlu0 %1195
    %1197 = vrot.lane.b32.xlu0 %v46, 64
    %v1198 = vpop.permute.xlu0 %1197
    %1201 = vrot.lane.b32.xlu0 %v45, 96
    %v1202 = vpop.permute.xlu0 %1201
    %1203 = vrot.lane.b32.xlu0 %v46, 96
    %v1204 = vpop.permute.xlu0 %1203
    %v1207 = vsel %vm113, %v45, %v1190
    %v1208 = vsel %vm113, %v46, %v1192
    %v1209 = vsel %vm1019, %v1207, %v1196
    %v1210 = vsel %vm1019, %v1208, %v1198
    %vm1211 = vcmask 785408
    %v1212 = vsel %vm1211, %v1209, %v1202
    %v1213 = vsel %vm1211, %v1210, %v1204
    %v1214 = vmul.f32 %v1212, %v1181
    %v1215 = vmul.f32 %v1213, %v1186
    %v1216 = vld [vmem:[%s12] sm:$0xff]
    %v1217 = vld [vmem:[%s12 + $0x8] sm:$0xff]
    %v1218 = vld [vmem:[%s12 + $0x10] sm:$0xff]
    %v1219 = vld [vmem:[%s12 + $0x18] sm:$0xff]
    %v1220 = vld [vmem:[%s12 + $0x20] sm:$0xff]
    %v1221 = vld [vmem:[%s12 + $0x28] sm:$0xff]
    %v1222 = vld [vmem:[%s12 + $0x30] sm:$0xff]
    %v1223 = vld [vmem:[%s12 + $0x38] sm:$0xff]
    %v1224 = vld [vmem:[%s12 + $0x40] sm:$0xff]
    %v1225 = vld [vmem:[%s12 + $0x48] sm:$0xff]
    %v1226 = vld [vmem:[%s12 + $0x50] sm:$0xff]
    %v1227 = vld [vmem:[%s12 + $0x58] sm:$0xff]
    %v1228 = vld [vmem:[%s12 + $0x60] sm:$0xff]
    %v1229 = vld [vmem:[%s12 + $0x68] sm:$0xff]
    %v1230 = vld [vmem:[%s12 + $0x70] sm:$0xff]
    %v1231 = vld [vmem:[%s12 + $0x78] sm:$0xff]
    %v1232 = vld [vmem:[%s12 + $0x80] sm:$0xff]
    %v1233 = vld [vmem:[%s12 + $0x88] sm:$0xff]
    %v1234 = vld [vmem:[%s12 + $0x90] sm:$0xff]
    %v1235 = vld [vmem:[%s12 + $0x98] sm:$0xff]
    %v1236 = vld [vmem:[%s12 + $0xa0] sm:$0xff]
    %v1237 = vld [vmem:[%s12 + $0xa8] sm:$0xff]
    %v1238 = vld [vmem:[%s12 + $0xb0] sm:$0xff]
    %v1239 = vld [vmem:[%s12 + $0xb8] sm:$0xff]
    %v1241 = vsel %vm1019, %v1093, 0
    %v1244 = vsel %vm1019, %v1098, 0
    %1246 = vmatprep.subr.mxu0 0.0
    %1247 = vmatpush1.msra.mxu0 %v1216
    %1248 = vmatprep.subr.mxu0 0.0
    %1249 = vmatpush1.msra.mxu0 %v1217
    %1250 = vmatprep.subr.mxu0 0.0
    %1251 = vmatpush1.msra.mxu0 %v1218
    %1252 = vmatprep.subr.mxu0 0.0
    %1253 = vmatpush1.msra.mxu0 %v1219
    %1254 = vmatprep.subr.mxu0 0.0
    %1255 = vmatpush1.msra.mxu0 %v1220
    %1256 = vmatprep.subr.mxu0 0.0
    %1257 = vmatpush1.msra.mxu0 %v1221
    %1258 = vmatprep.subr.mxu0 0.0
    %1259 = vmatpush1.msra.mxu0 %v1222
    %1260 = vmatprep.subr.mxu0 0.0
    %1261 = vmatpush1.msra.mxu0 %v1223
    %1262 = vmatprep.subr.mxu0 0.0
    %1263 = vmatpush1.msra.mxu0 %v1224
    %1264 = vmatprep.subr.mxu0 0.0
    %1265 = vmatpush1.msra.mxu0 %v1225
    %1266 = vmatprep.subr.mxu0 0.0
    %1267 = vmatpush1.msra.mxu0 %v1226
    %1268 = vmatprep.subr.mxu0 0.0
    %1269 = vmatpush1.msra.mxu0 %v1227
    %1270 = vmatprep.subr.mxu0 0.0
    %1271 = vmatpush1.msra.mxu0 %v1228
    %1272 = vmatprep.subr.mxu0 0.0
    %1273 = vmatpush1.msra.mxu0 %v1229
    %1274 = vmatprep.subr.mxu0 0.0
    %1275 = vmatpush1.msra.mxu0 %v1230
    %1276 = vmatprep.subr.mxu0 0.0
    %1277 = vmatpush1.msra.mxu0 %v1231
    %1278 = vmatprep.subr.mxu0 0.0
    %1279 = vmatpush1.msra.mxu0 %v1232
    %1280 = vmatprep.subr.mxu0 0.0
    %1281 = vmatpush1.msra.mxu0 %v1233
    %1282 = vmatprep.subr.mxu0 0.0
    %1283 = vmatpush1.msra.mxu0 %v1234
    %1284 = vmatprep.subr.mxu0 0.0
    %1285 = vmatpush1.msra.mxu0 %v1235
    %1286 = vmatprep.subr.mxu0 0.0
    %1287 = vmatpush1.msra.mxu0 %v1236
    %1288 = vmatprep.subr.mxu0 0.0
    %1289 = vmatpush1.msra.mxu0 %v1237
    %1290 = vmatprep.subr.mxu0 0.0
    %1291 = vmatpush1.msra.mxu0 %v1238
    %1292 = vmatprep.subr.mxu0 0.0
    %1293 = vmatpush1.msra.mxu0 %v1239
    %1294 = vmatprep.subr.mxu0 0.0
    %1295 = vmatpush1.msra.mxu0 0.0
    %1296 = vmatprep.subr.mxu0 0.0
    %1297 = vmatpush1.msra.mxu0 0.0
    %1298 = vmatprep.subr.mxu0 0.0
    %1299 = vmatpush1.msra.mxu0 0.0
    %1300 = vmatprep.subr.mxu0 0.0
    %1301 = vmatpush1.msra.mxu0 0.0
    %1302 = vmatprep.subr.mxu0 0.0
    %1303 = vmatpush1.msra.mxu0 0.0
    %1304 = vmatprep.subr.mxu0 0.0
    %1305 = vmatpush1.msra.mxu0 0.0
    %1306 = vmatprep.subr.mxu0 0.0
    %1307 = vmatpush1.msra.mxu0 0.0
    %1308 = vmatprep.subr.mxu0 0.0
    %1309 = vmatpush1.msra.mxu0 0.0
    %1310 = vmatprep.mubr.f32.mxu0 %v1241
    %1311 = vmatmul.mubr.f32.gmra.mrb[0].mxu0 %v1214
    %v1312 = vpop.f32.mrb[0].mxu0
    %v1313 = vadd.f32 0.0, %v1312
    %v1314 = vpop.f32.mrb[0].mxu0
    %1315 = vmatprep.mubr.f32.mxu0 %v1244
    %1316 = vmatmul.mubr.f32.gmra.mrb[0].mxu0 %v1215
    %v1317 = vpop.f32.mrb[0].mxu0
    %v1318 = vadd.f32 0.0, %v1317
    %v1319 = vpop.f32.mrb[0].mxu0
    %1320 = vdwg.mxu0
    %v1321 = vmax.f32 %v1313, 0.0
    %v1322 = vmax.f32 %v1318, 0.0
    %v1323 = vand.u32 2147483647, %v1313
    %v1324 = vand.u32 2147483647, %v1318
    %v1325 = vsub.f32 0.0, %v1323
    %v1326 = vsub.f32 0.0, %v1324
    %v1327 = vmul.f32 %v1325, 1.442695
    %v1328 = vpow.pop %v1327
    %v1329 = vmul.f32 %v1326, 1.442695
    %v1330 = vpow.pop %v1329
    %v1331 = vadd.f32 %v1328, 1.0
    %v1332 = vadd.f32 %v1330, 1.0
    %v1333 = vlog2.pop %v1331
    %v1334 = vmul.f32 %v1333, 0.6931472
    %v1335 = vlog2.pop %v1332
    %v1336 = vmul.f32 %v1335, 0.6931472
    %v1337 = vadd.f32 %v1321, %v1334
    %v1338 = vadd.f32 %v1322, %v1336
    %v1339 = vsub.f32 %v1337, 0.6931472
    %v1340 = vsub.f32 %v1338, 0.6931472
    %1343 = vrot.lane.b32.xlu0 %v1313, 120
    %v1344 = vpop.permute.xlu0 %1343
    %1345 = vrot.lane.b32.xlu0 %v1318, 120
    %v1346 = vpop.permute.xlu0 %1345
    %v1349 = vmul.f32 %v1339, %v1344
    %v1350 = vmul.f32 %v1340, %v1346
    %1351 = vrot.lane.b32.xlu0 %v1313, 112
    %v1352 = vpop.permute.xlu0 %1351
    %1353 = vrot.lane.b32.xlu0 %v1318, 112
    %v1354 = vpop.permute.xlu0 %1353
    %v1357 = vmul.f32 %v1339, %v1352
    %v1358 = vmul.f32 %v1340, %v1354
    %1359 = vrot.lane.b32.xlu0 %v1313, 104
    %v1360 = vpop.permute.xlu0 %1359
    %1361 = vrot.lane.b32.xlu0 %v1318, 104
    %v1362 = vpop.permute.xlu0 %1361
    %v1365 = vmul.f32 %v1339, %v1360
    %v1366 = vmul.f32 %v1340, %v1362
    %1369 = vrot.lane.b32.xlu0 %v1357, 8
    %v1370 = vpop.permute.xlu0 %1369
    %1371 = vrot.lane.b32.xlu0 %v1358, 8
    %v1372 = vpop.permute.xlu0 %1371
    %1377 = vrot.lane.b32.xlu0 %v1365, 16
    %v1378 = vpop.permute.xlu0 %1377
    %1379 = vrot.lane.b32.xlu0 %v1366, 16
    %v1380 = vpop.permute.xlu0 %1379
    %v1383 = vsel %vm889, %v1339, %v1349
    %v1384 = vsel %vm889, %v1340, %v1350
    %v1385 = vsel %vm195, %v1383, %v1370
    %v1386 = vsel %vm195, %v1384, %v1372
    %vm1387 = vcmask 195584
    %v1388 = vsel %vm1387, %v1385, %v1378
    %v1389 = vsel %vm1387, %v1386, %v1380
    %v1390 = vadd.f32 %v45, %v1388
    %v1391 = vadd.f32 %v46, %v1389
    %1392 = vst.msk [vmem:[#allocation2] sm:$0xff] %vm113, %v1390
    %1393 = vst.msk [vmem:[#allocation2 + $0x8] sm:$0xff] %vm113, %v1391
    // Predicated region
    $region54: #{tpu_custom_call.1} parent=1 // pred_check
      _
    $region55: #{tpu_custom_call.1} parent=1 // pred_check_branch
      %1395 = sbr.rel (0) target = $region57
    $region56: #{tpu_custom_call.1} parent=1 // pred_region
      %s1397 = ssub.s32 256, 256
      %1398 = vsyncadd [#allocation3], %s1397
      %s1399 = sshll.u32 [#allocation2], 4
      %s1400 = int_to_ptr.vmem [resolvable:$true] %s1399
      %1405 = dma.vmem_to_hbm [thread:$0]  %s1400, 256, %s13, [#allocation3], 128, 128, 8
    $region57: #{tpu_custom_call.1} parent=1 // pred_fallthru
      _
    // Predicated region
    $region58: #{tpu_custom_call.1} parent=1 // pred_check
      _
    $region59: #{tpu_custom_call.1} parent=1 // pred_check_branch
      %1407 = sbr.rel (0) target = $region61
    $region60: #{tpu_custom_call.1} parent=1 // pred_region
      %1408 = dma.done [#allocation3], 256
    $region61: #{tpu_custom_call.1} parent=1 // pred_fallthru
      _
    %1409 = vsyncpa [#allocation3], 1

</llo_original>
